<compile_context>
chip_gen: v5e
topology: v5e:2x2
jax: 0.10.0
libtpu: 0.0.40
codegen_flags: <defaults>
</compile_context>

<pallas_src>
import functools

import numpy as np
import jax
import jax.numpy as jnp
from jax.experimental import pallas as pl
from jax.experimental.pallas import tpu as pltpu


# ----------------------------------------------------------------------------
# helpers (one-time layout plumbing)
# ----------------------------------------------------------------------------
def _round_up(x, m):
    return (x + m - 1) // m * m


def _pad2(a, shape):
    """Zero-pad a 2-D array up to `shape` (lane padding of weights / biases / tables)."""
    out = jnp.zeros(shape, jnp.float32)
    return out.at[: a.shape[0], : a.shape[1]].set(a.astype(jnp.float32))


def _build_toeplitz_conv_weight(conv_w, r_len, f_pad):
    """(ks, wd, F) conv taps -> block-Toeplitz (r_len*wd, L*f_pad), built on host once.

    Turns the whole valid conv over a review into a single MXU matmul
    (M = TN reviews, K = r_len*wd, N = L*f_pad).  Padded filters are zero so their
    pooled features are exactly 0 downstream.
    TODO(synk): for production r_len (>~100 words) on v7x, switch to a per-tap /
    im2col scheme to avoid the O(r_len^2) weight and the structural-zero MXU work.
    """
    conv_w = np.asarray(conv_w, np.float32)
    ks, wd, F = conv_w.shape
    L = r_len - ks + 1
    big = np.zeros((r_len, wd, L, f_pad), np.float32)
    for l in range(L):
        for k in range(ks):
            big[l + k, :, l, :F] = conv_w[k]
    return big.reshape(r_len * wd, L * f_pad)


def prepare_params(params, *, r_len):
    """One-time weight re-layout, hoisted out of the per-call forward."""
    E = params["review_w"].shape[1]
    F = params["review_w"].shape[0]
    f_pad = _round_up(max(F, 128), 128)
    e_pad = _round_up(max(E, 128), 128)

    wr = _pad2(params["review_w"], (f_pad, e_pad))
    wid = _pad2(params["id_linear_w"], (e_pad, e_pad))
    uiid_tbl = params["u_i_id_embedding"]
    return {
        # embedding tables
        "id_embedding": params["id_embedding"].astype(jnp.float32),
        "word_embs_bf16": params["word_embs"].astype(jnp.bfloat16),
        # relu folded into the table (relu(gather(t)) == gather(relu(t))), lane padded
        "uiid_relu_pad": _pad2(jnp.maximum(uiid_tbl, 0.0), (uiid_tbl.shape[0], e_pad)),
        # conv (block-Toeplitz, bf16)
        "w_big_bf16": jnp.asarray(
            _build_toeplitz_conv_weight(params["conv_w"], r_len, f_pad), jnp.bfloat16),
        "b_conv": _pad2(params["conv_b"], (1, f_pad)),
        # merged review/id mixing: [fea | relu(uiid)] @ [review_w ; id_linear_w]
        "w_mix_bf16": jnp.concatenate([wr, wid], axis=0).astype(jnp.bfloat16),
        "b_mix": _pad2(params["review_b"], (1, e_pad)),
        "watt": _pad2(params["att_w"].T, (1, e_pad)),
        # att_b dropped: softmax over the review axis is invariant to a uniform bias.
        "wfc_bf16": _pad2(params["fc_w"], (f_pad, e_pad)).astype(jnp.bfloat16),
        "bfc": _pad2(params["fc_b"], (1, e_pad)),
    }


# ----------------------------------------------------------------------------
# Kernel 1: text-CNN -> relu -> max-pool over time   (TN reviews per grid step)
# ----------------------------------------------------------------------------
def conv_pool_kernel(x_ref, w_ref, b_ref, out_ref):
    # x_ref   : (TN, r_len*wd) bf16    flattened word embeddings of TN reviews
    # w_ref   : (r_len*wd, L*Fp) bf16  block-Toeplitz conv weight (zero padded)
    # b_ref   : (1, Fp) f32
    # out_ref : (TN, Fp) f32           relu(max-over-time(conv)) -- lane-dense store
    fp = out_ref.shape[1]
    y = jnp.dot(x_ref[...], w_ref[...], preferred_element_type=jnp.float32)  # (TN, L*Fp)
    num_pos = y.shape[1] // fp
    m = y[:, 0:fp]
    for l in range(1, num_pos):                 # static 128-aligned lane slices
        m = jnp.maximum(m, y[:, l * fp:(l + 1) * fp])
    # relu(max_l conv_l + b) == max_l relu(conv_l + b)  (relu monotone, shared bias)
    out_ref[...] = jnp.maximum(m + b_ref[...], 0.0)


def conv_pool(x, w_big, b_conv, *, f_pad, tile_n=512):
    # x: (N, r_len*wd) bf16 -> (N, f_pad) f32
    N, K = x.shape
    lfp = w_big.shape[1]
    # 16-row granularity: bf16 sublane packing, keeps loads/stores tile-aligned.
    tn = min(tile_n, _round_up(N, 16))
    n_pad = _round_up(N, tn)
    if n_pad != N:
        x = jnp.pad(x, ((0, n_pad - N), (0, 0)))
    out = pl.pallas_call(
        conv_pool_kernel,
        out_shape=jax.ShapeDtypeStruct((n_pad, f_pad), jnp.float32),
        grid=(n_pad // tn,),
        in_specs=[
            pl.BlockSpec((tn, K), lambda i: (i, 0)),
            pl.BlockSpec((K, lfp), lambda i: (0, 0)),     # resident weight, fetched once
            pl.BlockSpec((1, f_pad), lambda i: (0, 0)),
        ],
        out_specs=pl.BlockSpec((tn, f_pad), lambda i: (i, 0)),
        # NOTE: at tn=512 VMEM use is ~3 MiB (well under the scoped default on all
        # gens); raise vmem_limit_bytes here only if tile_n is pushed to 1024+.
        compiler_params=pltpu.CompilerParams(dimension_semantics=("parallel",)),
    )(x, w_big, b_conv)
    return out[:N]


# ----------------------------------------------------------------------------
# Kernel 2: merged review/id mixing + attention softmax + weighted sum + fc
#           (TB samples per grid step; one lane-dense K=256 mixing matmul)
# ----------------------------------------------------------------------------
def attn_kernel(cat_ref, wmix_ref, bmix_ref, watt_ref, wfc_ref, bfc_ref, out_ref,
                *, r_num):
    # cat_ref  : (TB, Rp, Fp+Ep) f32  [pooled fea | relu(uiid)]  (Rp % 8 == 0)
    # wmix_ref : (Fp+Ep, Ep) bf16     [review_w ; id_linear_w]
    # bmix_ref : (1, Ep) f32          watt_ref: (1, Ep) f32
    # wfc_ref  : (Fp, Ep) bf16        bfc_ref : (1, Ep) f32
    # out_ref  : (TB, Ep) f32         lane-dense output block
    tb, rp, kc = cat_ref.shape
    fp = wfc_ref.shape[0]
    ep = wmix_ref.shape[1]

    cat = cat_ref[...]                                    # (TB, Rp, Fp+Ep)
    fea = cat[:, :, :fp]                                  # 128-aligned lane slice
    cat2 = cat.reshape(tb * rp, kc)                       # Rp % 8 == 0 -> tile aligned
    rs = jnp.maximum(
        jnp.dot(cat2.astype(jnp.bfloat16), wmix_ref[...],
                preferred_element_type=jnp.float32) + bmix_ref[...], 0.0)  # (TB*Rp, Ep)
    rs3 = rs.reshape(tb, rp, ep)

    # attention logit: VPU multiply + lane reduce (no 1-lane MXU matvec, no att bias)
    att = jnp.sum(rs3 * watt_ref[...], axis=-1, keepdims=True)        # (TB, Rp, 1)

    # mask padded review rows (positions >= r_num) before the softmax
    pos = jax.lax.broadcasted_iota(jnp.int32, (rp, ep), 0)            # (Rp, Ep)
    neg = jnp.where(pos < r_num, jnp.float32(0.0), jnp.float32(-1e30))
    att = att + jnp.max(neg, axis=-1, keepdims=True)[None]            # (TB, Rp, 1)

    att = att - jnp.max(att, axis=1, keepdims=True)                   # stable softmax
    ex = jnp.exp(att)
    w = ex * pl.reciprocal(jnp.sum(ex, axis=1, keepdims=True), approx=True)  # (TB,Rp,1)

    r_fea = jnp.sum(fea * w, axis=1)                                  # (TB, Fp)
    # TODO(synk): nn.Dropout is a no-op in eval mode; train-mode RNG mask omitted.
    out_ref[...] = (jnp.dot(r_fea.astype(jnp.bfloat16), wfc_ref[...],
                            preferred_element_type=jnp.float32) + bfc_ref[...])


def attention_fc(cat, w_mix, b_mix, watt, wfc, bfc, *, r_num, tile_b=128):
    # cat: (bs, r_pad, Fp+Ep) -> (bs, Ep)
    bs, r_pad, kc = cat.shape
    e_pad = w_mix.shape[1]
    f_pad = wfc.shape[0]
    tb = min(tile_b, _round_up(bs, 8))
    bs_pad = _round_up(bs, tb)
    if bs_pad != bs:
        cat = jnp.pad(cat, ((0, bs_pad - bs), (0, 0), (0, 0)))
    out = pl.pallas_call(
        functools.partial(attn_kernel, r_num=r_num),
        out_shape=jax.ShapeDtypeStruct((bs_pad, e_pad), jnp.float32),
        grid=(bs_pad // tb,),
        in_specs=[
            pl.BlockSpec((tb, r_pad, kc), lambda b: (b, 0, 0)),
            pl.BlockSpec((kc, e_pad), lambda b: (0, 0)),
            pl.BlockSpec((1, e_pad), lambda b: (0, 0)),
            pl.BlockSpec((1, e_pad), lambda b: (0, 0)),
            pl.BlockSpec((f_pad, e_pad), lambda b: (0, 0)),
            pl.BlockSpec((1, e_pad), lambda b: (0, 0)),
        ],
        out_specs=pl.BlockSpec((tb, e_pad), lambda b: (b, 0)),
        compiler_params=pltpu.CompilerParams(dimension_semantics=("parallel",)),
    )(cat, w_mix, b_mix, watt, wfc, bfc)
    return out[:bs]


# ----------------------------------------------------------------------------
# Full forward (glue in plain JAX, hot paths in Pallas)
# ----------------------------------------------------------------------------
def narre_net_forward(prep, reviews, ids, ids_list):
    bs, r_num, r_len = reviews.shape
    wd = prep["word_embs_bf16"].shape[1]
    f_pad = prep["b_conv"].shape[1]
    E = prep["id_embedding"].shape[1]

    # --- embedding lookups (XLA gathers; glue) ---
    # TODO(synk): fuse the word-embedding gather into the conv kernel
    # (PrefetchScalarGridSpec token ids + per-row DMA) so rev_emb never hits HBM.
    rev_emb = jnp.take(prep["word_embs_bf16"], reviews.reshape(-1), axis=0)
    x = rev_emb.reshape(bs * r_num, r_len * wd)                 # bf16, lane-dense
    id_emb = jnp.take(prep["id_embedding"], ids, axis=0)        # (bs, E) f32
    uiid = jnp.take(prep["uiid_relu_pad"], ids_list, axis=0)    # (bs, r_num, Ep), relu folded

    # --- Pallas kernel 1: CNN + relu + max-over-time pooling ---
    fea = conv_pool(x, prep["w_big_bf16"], prep["b_conv"], f_pad=f_pad)  # (bs*r_num, Fp)
    fea3 = fea.reshape(bs, r_num, f_pad)

    # --- Pallas kernel 2: attention + weighted sum + fc_layer ---
    # pad r_num to a sublane multiple so the in-kernel (TB,R,.)<->(TB*R,.) reshapes are
    # tile-aligned; padded review rows are masked inside the kernel before the softmax.
    r_pad = _round_up(r_num, 8)
    cat = jnp.concatenate([fea3, uiid], axis=-1)                # (bs, r_num, Fp+Ep)
    if r_pad != r_num:
        cat = jnp.pad(cat, ((0, 0), (0, r_pad - r_num), (0, 0)))
    fc_out = attention_fc(cat, prep["w_mix_bf16"], prep["b_mix"], prep["watt"],
                          prep["wfc_bf16"], prep["bfc"], r_num=r_num)     # (bs, Ep)

    return jnp.stack([id_emb, fc_out[:, :E]], axis=1)           # (bs, 2, E)


# ----------------------------------------------------------------------------
# Pure-JAX reference (f32, for correctness check)
# ----------------------------------------------------------------------------
def narre_net_reference(params, reviews, ids, ids_list):
    bs, r_num, r_len = reviews.shape
    wd = params["word_embs"].shape[1]
    ks, _, F = params["conv_w"].shape

    rev_emb = jnp.take(params["word_embs"], reviews.reshape(-1), axis=0)
    rev_emb = rev_emb.reshape(bs * r_num, r_len, wd)
    id_emb = jnp.take(params["id_embedding"], ids, axis=0)
    uiid_emb = jnp.take(params["u_i_id_embedding"], ids_list, axis=0)

    L = r_len - ks + 1
    conv = jnp.zeros((bs * r_num, L, F), jnp.float32)
    for k in range(ks):
        conv = conv + jnp.einsum("nlw,wf->nlf", rev_emb[:, k:k + L, :],
                                 params["conv_w"][k])
    fea = jnp.max(jax.nn.relu(conv + params["conv_b"]), axis=1)      # (N, F)
    fea = fea.reshape(bs, r_num, F)

    rs_mix = jax.nn.relu(fea @ params["review_w"] + params["review_b"]
                         + jax.nn.relu(uiid_emb) @ params["id_linear_w"])
    att = rs_mix @ params["att_w"] + params["att_b"]
    att_w = jax.nn.softmax(att, axis=1)
    r_fea = jnp.sum(fea * att_w, axis=1)
    fc_out = r_fea @ params["fc_w"] + params["fc_b"]
    return jnp.stack([id_emb, fc_out], axis=1)


# ----------------------------------------------------------------------------
# Deterministic parameter construction (synthetic; shapes from Net.__init__)
# ----------------------------------------------------------------------------
def init_params(key, *, vocab_size, id_num, ui_id_num, word_dim,
                id_emb_size, filters_num, kernel_size):
    ks = jax.random.split(key, 10)
    u = lambda k, shape: jax.random.uniform(k, shape, jnp.float32, -0.1, 0.1)
    xavier = lambda k, shape, fan_in, fan_out: (
        jax.random.normal(k, shape, jnp.float32) * jnp.sqrt(2.0 / (fan_in + fan_out)))

    F, E, WD = filters_num, id_emb_size, word_dim
    return {
        "id_embedding":      u(ks[0], (id_num, E)),
        "word_embs":         xavier(ks[1], (vocab_size, WD), vocab_size, WD),
        "u_i_id_embedding":  u(ks[2], (ui_id_num, E)),
        # conv weight stored as (ks, wd, F) == torch (F,1,ks,wd) transposed
        "conv_w":            xavier(ks[3], (kernel_size, WD, F), kernel_size * WD, F),
        "conv_b":            jnp.full((1, F), 0.1, jnp.float32),
        # linear weights stored transposed (in, out) so y = x @ W + b
        "review_w":          u(ks[4], (F, E)),
        "review_b":          jnp.full((1, E), 0.1, jnp.float32),
        "id_linear_w":       u(ks[5], (E, E)),
        "att_w":             u(ks[6], (E, 1)),
        "att_b":             jnp.full((1, 1), 0.1, jnp.float32),
        "fc_w":              u(ks[7], (F, E)),
        "fc_b":              jnp.full((1, E), 0.1, jnp.float32),
    }


if __name__ == "__main__":
    # small config consistent with the module's forward
    bs, r_num, r_len = 2, 4, 8
    vocab_size, word_dim = 100, 32
    id_emb_size, filters_num, kernel_size = 32, 64, 3
    user_num, item_num = 20, 30     # uori='user': id_num=user_num, ui_id_num=item_num

    key = jax.random.PRNGKey(0)
    kp, kr, ki, kl = jax.random.split(key, 4)

    params = init_params(kp, vocab_size=vocab_size, id_num=user_num,
                         ui_id_num=item_num, word_dim=word_dim,
                         id_emb_size=id_emb_size, filters_num=filters_num,
                         kernel_size=kernel_size)

    reviews = jax.random.randint(kr, (bs, r_num, r_len), 0, vocab_size, jnp.int32)
    ids = jax.random.randint(ki, (bs,), 0, user_num, jnp.int32)
    ids_list = jax.random.randint(kl, (bs, r_num), 0, item_num, jnp.int32)

    # one-time weight re-layout (hoisted out of the jitted per-call forward)
    prep = prepare_params(params, r_len=r_len)

    fwd = jax.jit(narre_net_forward)
    out = jax.block_until_ready(fwd(prep, reviews, ids, ids_list))

    ref = jax.block_until_ready(narre_net_reference(params, reviews, ids, ids_list))
    assert out.shape == (bs, 2, id_emb_size), out.shape
    # bf16 MXU operands (f32 accumulation) -> relaxed tolerance vs the f32 reference
    assert jnp.allclose(out, ref, atol=3e-2, rtol=3e-2), "mismatch vs reference"

    print("KERNEL_OK")
</pallas_src>

<mosaic_0001>
module attributes {stable_mosaic.version = 11 : i64} {
  func.func @conv_pool_kernel(%arg0: i32, %arg1: memref<16x256xbf16, #tpu.memory_space<vmem>>, %arg2: memref<256x768xbf16, #tpu.memory_space<vmem>>, %arg3: memref<1x128xf32, #tpu.memory_space<vmem>>, %arg4: memref<16x128xf32, #tpu.memory_space<vmem>>) attributes {dimension_semantics = [#tpu.dimension_semantics<parallel>], iteration_bounds = array<i64: 1>, scalar_prefetch = 0 : i64, scratch_operands = 0 : i64, tpu.core_type = #tpu.core_type<tc>, window_params = [{transform_indices = @transform_0, window_bounds = array<i64: 16, 256>}, {pipeline_mode = #tpu.pipeline_mode<synchronous>, transform_indices = @transform_1, window_bounds = array<i64: 256, 768>}, {pipeline_mode = #tpu.pipeline_mode<synchronous>, transform_indices = @transform_2, window_bounds = array<i64: 1, 128>}, {transform_indices = @transform_3, window_bounds = array<i64: 16, 128>}]} {
    %c0 = arith.constant 0 : index
    %c0_0 = arith.constant 0 : index
    %0 = vector.load %arg1[%c0, %c0_0] : memref<16x256xbf16, #tpu.memory_space<vmem>>, vector<16x256xbf16>
    %c0_1 = arith.constant 0 : index
    %c0_2 = arith.constant 0 : index
    %1 = vector.load %arg2[%c0_1, %c0_2] : memref<256x768xbf16, #tpu.memory_space<vmem>>, vector<256x768xbf16>
    %cst = arith.constant dense<0.000000e+00> : vector<16x768xf32>
    %2 = tpu.matmul %0, %1, %cst {dimension_numbers = #tpu.dot_dimension_numbers<[1], [0], [0], [1], [0, 0, 1, 1], [], []>} : vector<16x256xbf16>, vector<256x768xbf16>, vector<16x768xf32> -> vector<16x768xf32>
    %3 = vector.extract_strided_slice %2 {offsets = [0, 0], sizes = [16, 128], strides = [1, 1]} : vector<16x768xf32> to vector<16x128xf32>
    %4 = vector.extract_strided_slice %2 {offsets = [0, 128], sizes = [16, 128], strides = [1, 1]} : vector<16x768xf32> to vector<16x128xf32>
    %5 = arith.maximumf %3, %4 : vector<16x128xf32>
    %6 = vector.extract_strided_slice %2 {offsets = [0, 256], sizes = [16, 128], strides = [1, 1]} : vector<16x768xf32> to vector<16x128xf32>
    %7 = arith.maximumf %5, %6 : vector<16x128xf32>
    %8 = vector.extract_strided_slice %2 {offsets = [0, 384], sizes = [16, 128], strides = [1, 1]} : vector<16x768xf32> to vector<16x128xf32>
    %9 = arith.maximumf %7, %8 : vector<16x128xf32>
    %10 = vector.extract_strided_slice %2 {offsets = [0, 512], sizes = [16, 128], strides = [1, 1]} : vector<16x768xf32> to vector<16x128xf32>
    %11 = arith.maximumf %9, %10 : vector<16x128xf32>
    %12 = vector.extract_strided_slice %2 {offsets = [0, 640], sizes = [16, 128], strides = [1, 1]} : vector<16x768xf32> to vector<16x128xf32>
    %13 = arith.maximumf %11, %12 : vector<16x128xf32>
    %c0_3 = arith.constant 0 : index
    %c0_4 = arith.constant 0 : index
    %14 = vector.load %arg3[%c0_3, %c0_4] : memref<1x128xf32, #tpu.memory_space<vmem>>, vector<1x128xf32>
    %15 = vector.broadcast %14 : vector<1x128xf32> to vector<16x128xf32>
    %16 = arith.addf %13, %15 : vector<16x128xf32>
    %cst_5 = arith.constant 0.000000e+00 : f32
    %17 = vector.broadcast %cst_5 : f32 to vector<16x128xf32>
    %18 = arith.maximumf %16, %17 : vector<16x128xf32>
    %c0_6 = arith.constant 0 : index
    %c0_7 = arith.constant 0 : index
    %19 = vector.load %arg4[%c0_6, %c0_7] : memref<16x128xf32, #tpu.memory_space<vmem>>, vector<16x128xf32>
    tpu.vector_store %arg4[%c0_6, %c0_7], %18 {strides = array<i32>} : memref<16x128xf32, #tpu.memory_space<vmem>>, vector<16x128xf32>,
    return
  }
  func.func @transform_0(%arg0: i32) -> (i32, i32) {
    %c0_i32 = arith.constant 0 : i32
    %c0_i32_0 = arith.constant 0 : i32
    return %arg0, %c0_i32 : i32, i32
  }
  func.func @transform_1(%arg0: i32) -> (i32, i32) {
    %c0_i32 = arith.constant 0 : i32
    %c0_i32_0 = arith.constant 0 : i32
    %c0_i32_1 = arith.constant 0 : i32
    return %c0_i32, %c0_i32_0 : i32, i32
  }
  func.func @transform_2(%arg0: i32) -> (i32, i32) {
    %c0_i32 = arith.constant 0 : i32
    %c0_i32_0 = arith.constant 0 : i32
    %c0_i32_1 = arith.constant 0 : i32
    return %c0_i32, %c0_i32_0 : i32, i32
  }
  func.func @transform_3(%arg0: i32) -> (i32, i32) {
    %c0_i32 = arith.constant 0 : i32
    %c0_i32_0 = arith.constant 0 : i32
    return %arg0, %c0_i32 : i32, i32
  }
}

module attributes {stable_mosaic.version = 11 : i64} {
  func.func @attn_kernel(%arg0: i32, %arg1: memref<8x8x256xf32, #tpu.memory_space<vmem>>, %arg2: memref<256x128xbf16, #tpu.memory_space<vmem>>, %arg3: memref<1x128xf32, #tpu.memory_space<vmem>>, %arg4: memref<1x128xf32, #tpu.memory_space<vmem>>, %arg5: memref<128x128xbf16, #tpu.memory_space<vmem>>, %arg6: memref<1x128xf32, #tpu.memory_space<vmem>>, %arg7: memref<8x128xf32, #tpu.memory_space<vmem>>) attributes {dimension_semantics = [#tpu.dimension_semantics<parallel>], iteration_bounds = array<i64: 1>, scalar_prefetch = 0 : i64, scratch_operands = 0 : i64, tpu.core_type = #tpu.core_type<tc>, window_params = [{transform_indices = @transform_0, window_bounds = array<i64: 8, 8, 256>}, {pipeline_mode = #tpu.pipeline_mode<synchronous>, transform_indices = @transform_1, window_bounds = array<i64: 256, 128>}, {pipeline_mode = #tpu.pipeline_mode<synchronous>, transform_indices = @transform_2, window_bounds = array<i64: 1, 128>}, {pipeline_mode = #tpu.pipeline_mode<synchronous>, transform_indices = @transform_3, window_bounds = array<i64: 1, 128>}, {pipeline_mode = #tpu.pipeline_mode<synchronous>, transform_indices = @transform_4, window_bounds = array<i64: 128, 128>}, {pipeline_mode = #tpu.pipeline_mode<synchronous>, transform_indices = @transform_5, window_bounds = array<i64: 1, 128>}, {transform_indices = @transform_6, window_bounds = array<i64: 8, 128>}]} {
    %c0 = arith.constant 0 : index
    %c0_0 = arith.constant 0 : index
    %c0_1 = arith.constant 0 : index
    %0 = vector.load %arg1[%c0, %c0_0, %c0_1] : memref<8x8x256xf32, #tpu.memory_space<vmem>>, vector<8x8x256xf32>
    %1 = vector.extract_strided_slice %0 {offsets = [0, 0, 0], sizes = [8, 8, 128], strides = [1, 1, 1]} : vector<8x8x256xf32> to vector<8x8x128xf32>
    %2 = vector.shape_cast %0 : vector<8x8x256xf32> to vector<64x256xf32>
    %3 = arith.truncf %2 : vector<64x256xf32> to vector<64x256xbf16>
    %c0_2 = arith.constant 0 : index
    %c0_3 = arith.constant 0 : index
    %4 = vector.load %arg2[%c0_2, %c0_3] : memref<256x128xbf16, #tpu.memory_space<vmem>>, vector<256x128xbf16>
    %cst = arith.constant dense<0.000000e+00> : vector<64x128xf32>
    %5 = tpu.matmul %3, %4, %cst {dimension_numbers = #tpu.dot_dimension_numbers<[1], [0], [0], [1], [0, 0, 1, 1], [], []>} : vector<64x256xbf16>, vector<256x128xbf16>, vector<64x128xf32> -> vector<64x128xf32>
    %c0_4 = arith.constant 0 : index
    %c0_5 = arith.constant 0 : index
    %6 = vector.load %arg3[%c0_4, %c0_5] : memref<1x128xf32, #tpu.memory_space<vmem>>, vector<1x128xf32>
    %7 = vector.broadcast %6 : vector<1x128xf32> to vector<64x128xf32>
    %8 = arith.addf %5, %7 : vector<64x128xf32>
    %cst_6 = arith.constant 0.000000e+00 : f32
    %9 = vector.broadcast %cst_6 : f32 to vector<64x128xf32>
    %10 = arith.maximumf %8, %9 : vector<64x128xf32>
    %11 = vector.shape_cast %10 : vector<64x128xf32> to vector<8x8x128xf32>
    %c0_7 = arith.constant 0 : index
    %c0_8 = arith.constant 0 : index
    %12 = vector.load %arg4[%c0_7, %c0_8] : memref<1x128xf32, #tpu.memory_space<vmem>>, vector<1x128xf32>
    %13 = vector.shape_cast %12 : vector<1x128xf32> to vector<1x1x128xf32>
    %14 = vector.broadcast %13 : vector<1x1x128xf32> to vector<8x8x128xf32>
    %15 = arith.mulf %11, %14 : vector<8x8x128xf32>
    %cst_9 = arith.constant dense<0.000000e+00> : vector<8x8xf32>
    %16 = vector.multi_reduction <add>, %15, %cst_9 [2] : vector<8x8x128xf32> to vector<8x8xf32>
    %17 = vector.shape_cast %16 : vector<8x8xf32> to vector<8x8x1xf32>
    %18 = tpu.iota {dimensions = array<i32: 0>} : vector<8x128xi32>
    %c4_i32 = arith.constant 4 : i32
    %19 = vector.broadcast %c4_i32 : i32 to vector<8x128xi32>
    %20 = arith.cmpi slt, %18, %19 : vector<8x128xi32>
    %cst_10 = arith.constant 0.000000e+00 : f32
    %cst_11 = arith.constant -1.000000e+30 : f32
    %21 = vector.broadcast %cst_10 : f32 to vector<8x128xf32>
    %22 = vector.broadcast %cst_11 : f32 to vector<8x128xf32>
    %23 = arith.select %20, %21, %22 : vector<8x128xi1>, vector<8x128xf32>
    %cst_12 = arith.constant dense<0xFF800000> : vector<8xf32>
    %24 = vector.multi_reduction <maximumf>, %23, %cst_12 [1] : vector<8x128xf32> to vector<8xf32>
    %25 = vector.shape_cast %24 : vector<8xf32> to vector<8x1xf32>
    %26 = vector.shape_cast %25 : vector<8x1xf32> to vector<1x8x1xf32>
    %27 = vector.broadcast %26 : vector<1x8x1xf32> to vector<8x8x1xf32>
    %28 = arith.addf %17, %27 : vector<8x8x1xf32>
    %cst_13 = arith.constant dense<0xFF800000> : vector<8x1xf32>
    %29 = vector.multi_reduction <maximumf>, %28, %cst_13 [1] : vector<8x8x1xf32> to vector<8x1xf32>
    %30 = vector.shape_cast %29 : vector<8x1xf32> to vector<8x1x1xf32>
    %31 = vector.broadcast %30 : vector<8x1x1xf32> to vector<8x8x1xf32>
    %32 = arith.subf %28, %31 : vector<8x8x1xf32>
    %33 = math.exp %32 : vector<8x8x1xf32>
    %cst_14 = arith.constant dense<0.000000e+00> : vector<8x1xf32>
    %34 = vector.multi_reduction <add>, %33, %cst_14 [1] : vector<8x8x1xf32> to vector<8x1xf32>
    %35 = vector.shape_cast %34 : vector<8x1xf32> to vector<8x1x1xf32>
    %36 = tpu.reciprocal %35 {approx = true} : vector<8x1x1xf32> -> vector<8x1x1xf32>
    %37 = vector.broadcast %36 : vector<8x1x1xf32> to vector<8x8x1xf32>
    %38 = arith.mulf %33, %37 : vector<8x8x1xf32>
    %39 = vector.broadcast %38 : vector<8x8x1xf32> to vector<8x8x128xf32>
    %40 = arith.mulf %1, %39 : vector<8x8x128xf32>
    %cst_15 = arith.constant dense<0.000000e+00> : vector<8x128xf32>
    %41 = vector.multi_reduction <add>, %40, %cst_15 [1] : vector<8x8x128xf32> to vector<8x128xf32>
    %42 = arith.truncf %41 : vector<8x128xf32> to vector<8x128xbf16>
    %c0_16 = arith.constant 0 : index
    %c0_17 = arith.constant 0 : index
    %43 = vector.load %arg5[%c0_16, %c0_17] : memref<128x128xbf16, #tpu.memory_space<vmem>>, vector<128x128xbf16>
    %cst_18 = arith.constant dense<0.000000e+00> : vector<8x128xf32>
    %44 = tpu.matmul %42, %43, %cst_18 {dimension_numbers = #tpu.dot_dimension_numbers<[1], [0], [0], [1], [0, 0, 1, 1], [], []>} : vector<8x128xbf16>, vector<128x128xbf16>, vector<8x128xf32> -> vector<8x128xf32>
    %c0_19 = arith.constant 0 : index
    %c0_20 = arith.constant 0 : index
    %45 = vector.load %arg6[%c0_19, %c0_20] : memref<1x128xf32, #tpu.memory_space<vmem>>, vector<1x128xf32>
    %46 = vector.broadcast %45 : vector<1x128xf32> to vector<8x128xf32>
    %47 = arith.addf %44, %46 : vector<8x128xf32>
    %c0_21 = arith.constant 0 : index
    %c0_22 = arith.constant 0 : index
    %48 = vector.load %arg7[%c0_21, %c0_22] : memref<8x128xf32, #tpu.memory_space<vmem>>, vector<8x128xf32>
    tpu.vector_store %arg7[%c0_21, %c0_22], %47 {strides = array<i32>} : memref<8x128xf32, #tpu.memory_space<vmem>>, vector<8x128xf32>,
    return
  }
  func.func @transform_0(%arg0: i32) -> (i32, i32, i32) {
    %c0_i32 = arith.constant 0 : i32
    %c0_i32_0 = arith.constant 0 : i32
    %c0_i32_1 = arith.constant 0 : i32
    return %arg0, %c0_i32, %c0_i32_0 : i32, i32, i32
  }
  func.func @transform_1(%arg0: i32) -> (i32, i32) {
    %c0_i32 = arith.constant 0 : i32
    %c0_i32_0 = arith.constant 0 : i32
    %c0_i32_1 = arith.constant 0 : i32
    return %c0_i32, %c0_i32_0 : i32, i32
  }
  func.func @transform_2(%arg0: i32) -> (i32, i32) {
    %c0_i32 = arith.constant 0 : i32
    %c0_i32_0 = arith.constant 0 : i32
    %c0_i32_1 = arith.constant 0 : i32
    return %c0_i32, %c0_i32_0 : i32, i32
  }
  func.func @transform_3(%arg0: i32) -> (i32, i32) {
    %c0_i32 = arith.constant 0 : i32
    %c0_i32_0 = arith.constant 0 : i32
    %c0_i32_1 = arith.constant 0 : i32
    return %c0_i32, %c0_i32_0 : i32, i32
  }
  func.func @transform_4(%arg0: i32) -> (i32, i32) {
    %c0_i32 = arith.constant 0 : i32
    %c0_i32_0 = arith.constant 0 : i32
    %c0_i32_1 = arith.constant 0 : i32
    return %c0_i32, %c0_i32_0 : i32, i32
  }
  func.func @transform_5(%arg0: i32) -> (i32, i32) {
    %c0_i32 = arith.constant 0 : i32
    %c0_i32_0 = arith.constant 0 : i32
    %c0_i32_1 = arith.constant 0 : i32
    return %c0_i32, %c0_i32_0 : i32, i32
  }
  func.func @transform_6(%arg0: i32) -> (i32, i32) {
    %c0_i32 = arith.constant 0 : i32
    %c0_i32_0 = arith.constant 0 : i32
    return %arg0, %c0_i32 : i32, i32
  }
}

</mosaic_0001>

<llo_original>
// kernel: narre_net_forward.3
$region0: #{narre_net_forward.3}
  #allocation0 [shape = 'u32[]', space=smem, size = 0x4, offset = 0x4, fixed_abs, tag = 'smem constant byte address 0x4 - core index']
  #allocation1 [shape = 'u32[72,128]{1,0:T(1,128)}', space=vmem, size = 0x9000, scoped, tag = 'internal scratch']
  %s0 = inlined_call_operand.vmem [shape: f32[8,8,256], index: 0, kind: input, shape index: {}]
  %s1 = inlined_call_operand.vmem [shape: bf16[256,128], index: 1, kind: input, shape index: {}]
  %s2 = inlined_call_operand.vmem [shape: f32[1,128], index: 2, kind: input, shape index: {}]
  %s3 = inlined_call_operand.vmem [shape: f32[1,128], index: 3, kind: input, shape index: {}]
  %s4 = inlined_call_operand.vmem [shape: bf16[128,128], index: 4, kind: input, shape index: {}]
  %s5 = inlined_call_operand.vmem [shape: f32[1,128], index: 5, kind: input, shape index: {}]
  %s6 = inlined_call_operand.vmem [shape: f32[8,128], index: 6, kind: output, shape index: {}]
  %s7 = sld [smem:[#allocation0]]
  $region34: #{narre_net_forward.3} parent=0
    _
  %s9 = ssub.s32 1, %s7
  %s10 = scalar_select 0, %s9, %s7
  // Predicated region
  $region2: #{narre_net_forward.3} parent=0 // pred_check
    _
  $region3: #{narre_net_forward.3} parent=0 // pred_check_branch
    %12 = sbr.rel (0) target = $region5
  $region4: #{narre_net_forward.3} parent=0 // pred_region
    _
  $region5: #{narre_net_forward.3} parent=0 // pred_fallthru
    _
  // Predicated region
  $region6: #{narre_net_forward.3} parent=0 // pred_check
    _
  $region7: #{narre_net_forward.3} parent=0 // pred_check_branch
    %14 = sbr.rel (0) target = $region9
  $region8: #{narre_net_forward.3} parent=0 // pred_region
    _
  $region9: #{narre_net_forward.3} parent=0 // pred_fallthru
    _
  // Predicated region
  $region10: #{narre_net_forward.3} parent=0 // pred_check
    _
  $region11: #{narre_net_forward.3} parent=0 // pred_check_branch
    %16 = sbr.rel (0) target = $region13
  $region12: #{narre_net_forward.3} parent=0 // pred_region
    _
  $region13: #{narre_net_forward.3} parent=0 // pred_fallthru
    _
  // Predicated region
  $region14: #{narre_net_forward.3} parent=0 // pred_check
    _
  $region15: #{narre_net_forward.3} parent=0 // pred_check_branch
    %18 = sbr.rel (0) target = $region17
  $region16: #{narre_net_forward.3} parent=0 // pred_region
    _
  $region17: #{narre_net_forward.3} parent=0 // pred_fallthru
    _
  // Predicated region
  $region18: #{narre_net_forward.3} parent=0 // pred_check
    _
  $region19: #{narre_net_forward.3} parent=0 // pred_check_branch
    %20 = sbr.rel (0) target = $region21
  $region20: #{narre_net_forward.3} parent=0 // pred_region
    _
  $region21: #{narre_net_forward.3} parent=0 // pred_fallthru
    _
  // Predicated region
  $region22: #{narre_net_forward.3} parent=0 // pred_check
    _
  $region23: #{narre_net_forward.3} parent=0 // pred_check_branch
    %22 = sbr.rel (0) target = $region25
  $region24: #{narre_net_forward.3} parent=0 // pred_region
    _
  $region25: #{narre_net_forward.3} parent=0 // pred_fallthru
    _
  %v23 = vld [vmem:[%s0] sm:$0xff]
  %v24 = vld [vmem:[%s0 + $0x8] sm:$0xff]
  %v25 = vld [vmem:[%s0 + $0x10] sm:$0xff]
  %v26 = vld [vmem:[%s0 + $0x18] sm:$0xff]
  %v27 = vld [vmem:[%s0 + $0x20] sm:$0xff]
  %v28 = vld [vmem:[%s0 + $0x28] sm:$0xff]
  %v29 = vld [vmem:[%s0 + $0x30] sm:$0xff]
  %v30 = vld [vmem:[%s0 + $0x38] sm:$0xff]
  %v31 = vld [vmem:[%s0 + $0x40] sm:$0xff]
  %v32 = vld [vmem:[%s0 + $0x48] sm:$0xff]
  %v33 = vld [vmem:[%s0 + $0x50] sm:$0xff]
  %v34 = vld [vmem:[%s0 + $0x58] sm:$0xff]
  %v35 = vld [vmem:[%s0 + $0x60] sm:$0xff]
  %v36 = vld [vmem:[%s0 + $0x68] sm:$0xff]
  %v37 = vld [vmem:[%s0 + $0x70] sm:$0xff]
  %v38 = vld [vmem:[%s0 + $0x78] sm:$0xff]
  %v39 = vpack.c.bf16 %v25, %v23
  %v40 = vpack.c.bf16 %v26, %v24
  %v41 = vpack.c.bf16 %v29, %v27
  %v42 = vpack.c.bf16 %v30, %v28
  %v43 = vpack.c.bf16 %v33, %v31
  %v44 = vpack.c.bf16 %v34, %v32
  %v45 = vpack.c.bf16 %v37, %v35
  %v46 = vpack.c.bf16 %v38, %v36
  %v47 = vld [vmem:[%s1] sm:$0xf]
  %v48 = vld [vmem:[%s1 + $0x4] sm:$0xf]
  %v49 = vld [vmem:[%s1 + $0x8] sm:$0xf]
  %v50 = vld [vmem:[%s1 + $0xc] sm:$0xf]
  %v51 = vld [vmem:[%s1 + $0x10] sm:$0xf]
  %v52 = vld [vmem:[%s1 + $0x14] sm:$0xf]
  %v53 = vld [vmem:[%s1 + $0x18] sm:$0xf]
  %v54 = vld [vmem:[%s1 + $0x1c] sm:$0xf]
  %v55 = vld [vmem:[%s1 + $0x20] sm:$0xf]
  %v56 = vld [vmem:[%s1 + $0x24] sm:$0xf]
  %v57 = vld [vmem:[%s1 + $0x28] sm:$0xf]
  %v58 = vld [vmem:[%s1 + $0x2c] sm:$0xf]
  %v59 = vld [vmem:[%s1 + $0x30] sm:$0xf]
  %v60 = vld [vmem:[%s1 + $0x34] sm:$0xf]
  %v61 = vld [vmem:[%s1 + $0x38] sm:$0xf]
  %v62 = vld [vmem:[%s1 + $0x3c] sm:$0xf]
  %v63 = vld [vmem:[%s1 + $0x40] sm:$0xf]
  %v64 = vld [vmem:[%s1 + $0x44] sm:$0xf]
  %v65 = vld [vmem:[%s1 + $0x48] sm:$0xf]
  %v66 = vld [vmem:[%s1 + $0x4c] sm:$0xf]
  %v67 = vld [vmem:[%s1 + $0x50] sm:$0xf]
  %v68 = vld [vmem:[%s1 + $0x54] sm:$0xf]
  %v69 = vld [vmem:[%s1 + $0x58] sm:$0xf]
  %v70 = vld [vmem:[%s1 + $0x5c] sm:$0xf]
  %v71 = vld [vmem:[%s1 + $0x60] sm:$0xf]
  %v72 = vld [vmem:[%s1 + $0x64] sm:$0xf]
  %v73 = vld [vmem:[%s1 + $0x68] sm:$0xf]
  %v74 = vld [vmem:[%s1 + $0x6c] sm:$0xf]
  %v75 = vld [vmem:[%s1 + $0x70] sm:$0xf]
  %v76 = vld [vmem:[%s1 + $0x74] sm:$0xf]
  %v77 = vld [vmem:[%s1 + $0x78] sm:$0xf]
  %v78 = vld [vmem:[%s1 + $0x7c] sm:$0xf]
  %v79 = vld [vmem:[%s2] sm:$0x1]
  %v81 = vperm.slane %v79, 0
  %v115 = vunpack.c.l.b16 %v47
  %v116 = vunpack.c.l.b16 %v48
  %v117 = vunpack.c.l.b16 %v49
  %v118 = vunpack.c.l.b16 %v50
  %v119 = vunpack.c.l.b16 %v51
  %v120 = vunpack.c.l.b16 %v52
  %v121 = vunpack.c.l.b16 %v53
  %v122 = vunpack.c.l.b16 %v54
  %v123 = vunpack.c.l.b16 %v55
  %v124 = vunpack.c.l.b16 %v56
  %v125 = vunpack.c.l.b16 %v57
  %v126 = vunpack.c.l.b16 %v58
  %v127 = vunpack.c.l.b16 %v59
  %v128 = vunpack.c.l.b16 %v60
  %v129 = vunpack.c.l.b16 %v61
  %v130 = vunpack.c.l.b16 %v62
  %v131 = vunpack.c.l.b16 %v63
  %v132 = vunpack.c.l.b16 %v64
  %v133 = vunpack.c.l.b16 %v65
  %v134 = vunpack.c.l.b16 %v66
  %v135 = vunpack.c.l.b16 %v67
  %v136 = vunpack.c.l.b16 %v68
  %v137 = vunpack.c.l.b16 %v69
  %v138 = vunpack.c.l.b16 %v70
  %v139 = vunpack.c.l.b16 %v71
  %v140 = vunpack.c.l.b16 %v72
  %v141 = vunpack.c.l.b16 %v73
  %v142 = vunpack.c.l.b16 %v74
  %v143 = vunpack.c.l.b16 %v75
  %v144 = vunpack.c.l.b16 %v76
  %v145 = vunpack.c.l.b16 %v77
  %v146 = vunpack.c.l.b16 %v78
  %v147 = vpack.c.b16 %v116, %v115
  %v148 = vpack.c.b16 %v118, %v117
  %v149 = vpack.c.b16 %v120, %v119
  %v150 = vpack.c.b16 %v122, %v121
  %v151 = vpack.c.b16 %v124, %v123
  %v152 = vpack.c.b16 %v126, %v125
  %v153 = vpack.c.b16 %v128, %v127
  %v154 = vpack.c.b16 %v130, %v129
  %v155 = vpack.c.b16 %v132, %v131
  %v156 = vpack.c.b16 %v134, %v133
  %v157 = vpack.c.b16 %v136, %v135
  %v158 = vpack.c.b16 %v138, %v137
  %v159 = vpack.c.b16 %v140, %v139
  %v160 = vpack.c.b16 %v142, %v141
  %v161 = vpack.c.b16 %v144, %v143
  %v162 = vpack.c.b16 %v146, %v145
  %179 = vmatpush.bf16.msra.mxu0 %v154
  %180 = vmatpush.bf16.msra.mxu0 %v153
  %181 = vmatpush.bf16.msra.mxu0 %v152
  %182 = vmatpush.bf16.msra.mxu0 %v151
  %183 = vmatpush.bf16.msra.mxu0 %v150
  %184 = vmatpush.bf16.msra.mxu0 %v149
  %185 = vmatpush.bf16.msra.mxu0 %v148
  %186 = vmatpush.bf16.msra.mxu0 %v147
  %187 = vmatmul.bf16.gmra.mxu0 %v39
  %v188 = vpop.f32.mrf.mxu0
  %v189 = vadd.f32 %v81, %v188
  %v190 = vpop.f32.mrf.mxu0
  %v191 = vadd.f32 %v81, %v190
  %192 = vmatmul.bf16.gmra.mxu0 %v41
  %v193 = vpop.f32.mrf.mxu0
  %v194 = vadd.f32 %v81, %v193
  %v195 = vpop.f32.mrf.mxu0
  %v196 = vadd.f32 %v81, %v195
  %197 = vmatmul.bf16.gmra.mxu0 %v43
  %v198 = vpop.f32.mrf.mxu0
  %v199 = vadd.f32 %v81, %v198
  %v200 = vpop.f32.mrf.mxu0
  %v201 = vadd.f32 %v81, %v200
  %202 = vmatmul.bf16.gmra.mxu0 %v45
  %v203 = vpop.f32.mrf.mxu0
  %v204 = vadd.f32 %v81, %v203
  %v205 = vpop.f32.mrf.mxu0
  %v206 = vadd.f32 %v81, %v205
  %207 = vdwg.mxu0
  %208 = vmatpush.bf16.msra.mxu0 %v162
  %209 = vmatpush.bf16.msra.mxu0 %v161
  %210 = vmatpush.bf16.msra.mxu0 %v160
  %211 = vmatpush.bf16.msra.mxu0 %v159
  %212 = vmatpush.bf16.msra.mxu0 %v158
  %213 = vmatpush.bf16.msra.mxu0 %v157
  %214 = vmatpush.bf16.msra.mxu0 %v156
  %215 = vmatpush.bf16.msra.mxu0 %v155
  %216 = vmatmul.bf16.gmra.mxu0 %v40
  %v217 = vpop.f32.mrf.mxu0
  %v218 = vadd.f32 %v189, %v217
  %v219 = vpop.f32.mrf.mxu0
  %v220 = vadd.f32 %v191, %v219
  %221 = vmatmul.bf16.gmra.mxu0 %v42
  %v222 = vpop.f32.mrf.mxu0
  %v223 = vadd.f32 %v194, %v222
  %v224 = vpop.f32.mrf.mxu0
  %v225 = vadd.f32 %v196, %v224
  %226 = vmatmul.bf16.gmra.mxu0 %v44
  %v227 = vpop.f32.mrf.mxu0
  %v228 = vadd.f32 %v199, %v227
  %v229 = vpop.f32.mrf.mxu0
  %v230 = vadd.f32 %v201, %v229
  %231 = vmatmul.bf16.gmra.mxu0 %v46
  %v232 = vpop.f32.mrf.mxu0
  %v233 = vadd.f32 %v204, %v232
  %v234 = vpop.f32.mrf.mxu0
  %v235 = vadd.f32 %v206, %v234
  %236 = vdwg.mxu0
  %v237 = vmax.f32 %v218, 0.0
  %v238 = vmax.f32 %v220, 0.0
  %v239 = vmax.f32 %v223, 0.0
  %v240 = vmax.f32 %v225, 0.0
  %v241 = vmax.f32 %v228, 0.0
  %v242 = vmax.f32 %v230, 0.0
  %v243 = vmax.f32 %v233, 0.0
  %v244 = vmax.f32 %v235, 0.0
  %v245 = vld [vmem:[%s3] sm:$0x1]
  %v247 = vperm.slane %v245, 0
  %v249 = vmul.f32 %v237, %v247
  %v250 = vmul.f32 %v238, %v247
  %v251 = vmul.f32 %v239, %v247
  %v252 = vmul.f32 %v240, %v247
  %v253 = vmul.f32 %v241, %v247
  %v254 = vmul.f32 %v242, %v247
  %v255 = vmul.f32 %v243, %v247
  %v256 = vmul.f32 %v244, %v247
  %257 = vadd.xlane.f32.xlu0 %v249
  %v258 = vpop.xlane.xlu0 %257
  %259 = vadd.xlane.f32.xlu0 %v250
  %v260 = vpop.xlane.xlu0 %259
  %261 = vadd.xlane.f32.xlu0 %v251
  %v262 = vpop.xlane.xlu0 %261
  %263 = vadd.xlane.f32.xlu0 %v252
  %v264 = vpop.xlane.xlu0 %263
  %265 = vadd.xlane.f32.xlu0 %v253
  %v266 = vpop.xlane.xlu0 %265
  %267 = vadd.xlane.f32.xlu0 %v254
  %v268 = vpop.xlane.xlu0 %267
  %269 = vadd.xlane.f32.xlu0 %v255
  %v270 = vpop.xlane.xlu0 %269
  %271 = vadd.xlane.f32.xlu0 %v256
  %v272 = vpop.xlane.xlu0 %271
  %v273 = vlaneseq
  %v274 = vshrl.u32 %v273, 7
  %vm275 = vcmp.lt.s32.totalorder %v274, 4
  %v276 = vsel %vm275, 0.0, -1e+30
  %v277 = vadd.f32 %v258, %v276
  %v278 = vadd.f32 %v260, %v276
  %v279 = vadd.f32 %v262, %v276
  %v280 = vadd.f32 %v264, %v276
  %v281 = vadd.f32 %v266, %v276
  %v282 = vadd.f32 %v268, %v276
  %v283 = vadd.f32 %v270, %v276
  %v284 = vadd.f32 %v272, %v276
  %v285 = vrot.slane %v277, 4
  %v286 = vmax.f32 %v277, %v285
  %v287 = vrot.slane %v286, 2
  %v288 = vmax.f32 %v286, %v287
  %v289 = vrot.slane %v288, 1
  %v290 = vmax.f32 %v288, %v289
  %v291 = vrot.slane %v278, 4
  %v292 = vmax.f32 %v278, %v291
  %v293 = vrot.slane %v292, 2
  %v294 = vmax.f32 %v292, %v293
  %v295 = vrot.slane %v294, 1
  %v296 = vmax.f32 %v294, %v295
  %v297 = vrot.slane %v279, 4
  %v298 = vmax.f32 %v279, %v297
  %v299 = vrot.slane %v298, 2
  %v300 = vmax.f32 %v298, %v299
  %v301 = vrot.slane %v300, 1
  %v302 = vmax.f32 %v300, %v301
  %v303 = vrot.slane %v280, 4
  %v304 = vmax.f32 %v280, %v303
  %v305 = vrot.slane %v304, 2
  %v306 = vmax.f32 %v304, %v305
  %v307 = vrot.slane %v306, 1
  %v308 = vmax.f32 %v306, %v307
  %v309 = vrot.slane %v281, 4
  %v310 = vmax.f32 %v281, %v309
  %v311 = vrot.slane %v310, 2
  %v312 = vmax.f32 %v310, %v311
  %v313 = vrot.slane %v312, 1
  %v314 = vmax.f32 %v312, %v313
  %v315 = vrot.slane %v282, 4
  %v316 = vmax.f32 %v282, %v315
  %v317 = vrot.slane %v316, 2
  %v318 = vmax.f32 %v316, %v317
  %v319 = vrot.slane %v318, 1
  %v320 = vmax.f32 %v318, %v319
  %v321 = vrot.slane %v283, 4
  %v322 = vmax.f32 %v283, %v321
  %v323 = vrot.slane %v322, 2
  %v324 = vmax.f32 %v322, %v323
  %v325 = vrot.slane %v324, 1
  %v326 = vmax.f32 %v324, %v325
  %v327 = vrot.slane %v284, 4
  %v328 = vmax.f32 %v284, %v327
  %v329 = vrot.slane %v328, 2
  %v330 = vmax.f32 %v328, %v329
  %v331 = vrot.slane %v330, 1
  %v332 = vmax.f32 %v330, %v331
  %v333 = vsub.f32 %v277, %v290
  %v334 = vsub.f32 %v278, %v296
  %v335 = vsub.f32 %v279, %v302
  %v336 = vsub.f32 %v280, %v308
  %v337 = vsub.f32 %v281, %v314
  %v338 = vsub.f32 %v282, %v320
  %v339 = vsub.f32 %v283, %v326
  %v340 = vsub.f32 %v284, %v332
  %v341 = vmul.f32 %v333, 1.442695
  %v342 = vpow.pop %v341
  %v343 = vmul.f32 %v334, 1.442695
  %v344 = vpow.pop %v343
  %v345 = vmul.f32 %v335, 1.442695
  %v346 = vpow.pop %v345
  %v347 = vmul.f32 %v336, 1.442695
  %v348 = vpow.pop %v347
  %v349 = vmul.f32 %v337, 1.442695
  %v350 = vpow.pop %v349
  %v351 = vmul.f32 %v338, 1.442695
  %v352 = vpow.pop %v351
  %v353 = vmul.f32 %v339, 1.442695
  %v354 = vpow.pop %v353
  %v355 = vmul.f32 %v340, 1.442695
  %v356 = vpow.pop %v355
  %v357 = vrot.slane %v342, 4
  %v358 = vadd.f32 %v342, %v357
  %v359 = vrot.slane %v358, 2
  %v360 = vadd.f32 %v358, %v359
  %v361 = vrot.slane %v360, 1
  %v362 = vadd.f32 %v360, %v361
  %v363 = vrot.slane %v344, 4
  %v364 = vadd.f32 %v344, %v363
  %v365 = vrot.slane %v364, 2
  %v366 = vadd.f32 %v364, %v365
  %v367 = vrot.slane %v366, 1
  %v368 = vadd.f32 %v366, %v367
  %v369 = vrot.slane %v346, 4
  %v370 = vadd.f32 %v346, %v369
  %v371 = vrot.slane %v370, 2
  %v372 = vadd.f32 %v370, %v371
  %v373 = vrot.slane %v372, 1
  %v374 = vadd.f32 %v372, %v373
  %v375 = vrot.slane %v348, 4
  %v376 = vadd.f32 %v348, %v375
  %v377 = vrot.slane %v376, 2
  %v378 = vadd.f32 %v376, %v377
  %v379 = vrot.slane %v378, 1
  %v380 = vadd.f32 %v378, %v379
  %v381 = vrot.slane %v350, 4
  %v382 = vadd.f32 %v350, %v381
  %v383 = vrot.slane %v382, 2
  %v384 = vadd.f32 %v382, %v383
  %v385 = vrot.slane %v384, 1
  %v386 = vadd.f32 %v384, %v385
  %v387 = vrot.slane %v352, 4
  %v388 = vadd.f32 %v352, %v387
  %v389 = vrot.slane %v388, 2
  %v390 = vadd.f32 %v388, %v389
  %v391 = vrot.slane %v390, 1
  %v392 = vadd.f32 %v390, %v391
  %v393 = vrot.slane %v354, 4
  %v394 = vadd.f32 %v354, %v393
  %v395 = vrot.slane %v394, 2
  %v396 = vadd.f32 %v394, %v395
  %v397 = vrot.slane %v396, 1
  %v398 = vadd.f32 %v396, %v397
  %v399 = vrot.slane %v356, 4
  %v400 = vadd.f32 %v356, %v399
  %v401 = vrot.slane %v400, 2
  %v402 = vadd.f32 %v400, %v401
  %v403 = vrot.slane %v402, 1
  %v404 = vadd.f32 %v402, %v403
  %v405 = vrcp.pop %v362
  %v406 = vrcp.pop %v368
  %v407 = vrcp.pop %v374
  %v408 = vrcp.pop %v380
  %v409 = vrcp.pop %v386
  %v410 = vrcp.pop %v392
  %v411 = vrcp.pop %v398
  %v412 = vrcp.pop %v404
  %v413 = vmul.f32 %v342, %v405
  %v414 = vmul.f32 %v344, %v406
  %v415 = vmul.f32 %v346, %v407
  %v416 = vmul.f32 %v348, %v408
  %v417 = vmul.f32 %v350, %v409
  %v418 = vmul.f32 %v352, %v410
  %v419 = vmul.f32 %v354, %v411
  %v420 = vmul.f32 %v356, %v412
  %v421 = vmul.f32 %v23, %v413
  %v422 = vmul.f32 %v25, %v414
  %v423 = vmul.f32 %v27, %v415
  %v424 = vmul.f32 %v29, %v416
  %v425 = vmul.f32 %v31, %v417
  %v426 = vmul.f32 %v33, %v418
  %v427 = vmul.f32 %v35, %v419
  %v428 = vmul.f32 %v37, %v420
  %v429 = vrot.slane %v421, 4
  %v430 = vadd.f32 %v421, %v429
  %v431 = vrot.slane %v430, 2
  %v432 = vadd.f32 %v430, %v431
  %v433 = vrot.slane %v432, 1
  %v434 = vadd.f32 %v432, %v433
  %v435 = vrot.slane %v422, 4
  %v436 = vadd.f32 %v422, %v435
  %v437 = vrot.slane %v436, 2
  %v438 = vadd.f32 %v436, %v437
  %v439 = vrot.slane %v438, 1
  %v440 = vadd.f32 %v438, %v439
  %v441 = vrot.slane %v423, 4
  %v442 = vadd.f32 %v423, %v441
  %v443 = vrot.slane %v442, 2
  %v444 = vadd.f32 %v442, %v443
  %v445 = vrot.slane %v444, 1
  %v446 = vadd.f32 %v444, %v445
  %v447 = vrot.slane %v424, 4
  %v448 = vadd.f32 %v424, %v447
  %v449 = vrot.slane %v448, 2
  %v450 = vadd.f32 %v448, %v449
  %v451 = vrot.slane %v450, 1
  %v452 = vadd.f32 %v450, %v451
  %v453 = vrot.slane %v425, 4
  %v454 = vadd.f32 %v425, %v453
  %v455 = vrot.slane %v454, 2
  %v456 = vadd.f32 %v454, %v455
  %v457 = vrot.slane %v456, 1
  %v458 = vadd.f32 %v456, %v457
  %v459 = vrot.slane %v426, 4
  %v460 = vadd.f32 %v426, %v459
  %v461 = vrot.slane %v460, 2
  %v462 = vadd.f32 %v460, %v461
  %v463 = vrot.slane %v462, 1
  %v464 = vadd.f32 %v462, %v463
  %v465 = vrot.slane %v427, 4
  %v466 = vadd.f32 %v427, %v465
  %v467 = vrot.slane %v466, 2
  %v468 = vadd.f32 %v466, %v467
  %v469 = vrot.slane %v468, 1
  %v470 = vadd.f32 %v468, %v469
  %v471 = vrot.slane %v428, 4
  %v472 = vadd.f32 %v428, %v471
  %v473 = vrot.slane %v472, 2
  %v474 = vadd.f32 %v472, %v473
  %v475 = vrot.slane %v474, 1
  %v476 = vadd.f32 %v474, %v475
  %v477 = vpack.c.bf16 %v434, %v434
  %v478 = vpack.c.bf16 %v440, %v440
  %v479 = vpack.c.bf16 %v446, %v446
  %v480 = vpack.c.bf16 %v452, %v452
  %v481 = vpack.c.bf16 %v458, %v458
  %v482 = vpack.c.bf16 %v464, %v464
  %v483 = vpack.c.bf16 %v470, %v470
  %v484 = vpack.c.bf16 %v476, %v476
  %v485 = vld [vmem:[%s4] sm:$0xf]
  %v486 = vld [vmem:[%s4 + $0x4] sm:$0xf]
  %v487 = vld [vmem:[%s4 + $0x8] sm:$0xf]
  %v488 = vld [vmem:[%s4 + $0xc] sm:$0xf]
  %v489 = vld [vmem:[%s4 + $0x10] sm:$0xf]
  %v490 = vld [vmem:[%s4 + $0x14] sm:$0xf]
  %v491 = vld [vmem:[%s4 + $0x18] sm:$0xf]
  %v492 = vld [vmem:[%s4 + $0x1c] sm:$0xf]
  %v493 = vld [vmem:[%s4 + $0x20] sm:$0xf]
  %v494 = vld [vmem:[%s4 + $0x24] sm:$0xf]
  %v495 = vld [vmem:[%s4 + $0x28] sm:$0xf]
  %v496 = vld [vmem:[%s4 + $0x2c] sm:$0xf]
  %v497 = vld [vmem:[%s4 + $0x30] sm:$0xf]
  %v498 = vld [vmem:[%s4 + $0x34] sm:$0xf]
  %v499 = vld [vmem:[%s4 + $0x38] sm:$0xf]
  %v500 = vld [vmem:[%s4 + $0x3c] sm:$0xf]
  %v501 = vld [vmem:[%s5] sm:$0x1]
  %v503 = vperm.slane %v501, 0
  %v513 = vunpack.c.l.b16 %v477
  %v514 = vunpack.c.l.b16 %v478
  %v515 = vunpack.c.l.b16 %v479
  %v516 = vunpack.c.l.b16 %v480
  %v517 = vunpack.c.l.b16 %v481
  %v518 = vunpack.c.l.b16 %v482
  %v519 = vunpack.c.l.b16 %v483
  %v520 = vunpack.c.l.b16 %v484
  %vm521 = vcmask 1041409
  %v522 = vsel %vm521, %v514, %v513
  %vm523 = vcmask 1042434
  %v524 = vsel %vm523, %v515, %v522
  %vm525 = vcmask 1043459
  %v526 = vsel %vm525, %v516, %v524
  %vm527 = vcmask 1044484
  %v528 = vsel %vm527, %v517, %v526
  %vm529 = vcmask 1045509
  %v530 = vsel %vm529, %v518, %v528
  %vm531 = vcmask 1046534
  %v532 = vsel %vm531, %v519, %v530
  %vm533 = vcmask 1047559
  %v534 = vsel %vm533, %v520, %v532
  %v535 = vpack.c.b16 %v534, %v534
  %v553 = vunpack.c.l.b16 %v485
  %v554 = vunpack.c.l.b16 %v486
  %v555 = vunpack.c.l.b16 %v487
  %v556 = vunpack.c.l.b16 %v488
  %v557 = vunpack.c.l.b16 %v489
  %v558 = vunpack.c.l.b16 %v490
  %v559 = vunpack.c.l.b16 %v491
  %v560 = vunpack.c.l.b16 %v492
  %v561 = vunpack.c.l.b16 %v493
  %v562 = vunpack.c.l.b16 %v494
  %v563 = vunpack.c.l.b16 %v495
  %v564 = vunpack.c.l.b16 %v496
  %v565 = vunpack.c.l.b16 %v497
  %v566 = vunpack.c.l.b16 %v498
  %v567 = vunpack.c.l.b16 %v499
  %v568 = vunpack.c.l.b16 %v500
  %v569 = vpack.c.b16 %v554, %v553
  %v570 = vpack.c.b16 %v556, %v555
  %v571 = vpack.c.b16 %v558, %v557
  %v572 = vpack.c.b16 %v560, %v559
  %v573 = vpack.c.b16 %v562, %v561
  %v574 = vpack.c.b16 %v564, %v563
  %v575 = vpack.c.b16 %v566, %v565
  %v576 = vpack.c.b16 %v568, %v567
  %585 = vmatpush.bf16.msra.mxu0 %v576
  %586 = vmatpush.bf16.msra.mxu0 %v575
  %587 = vmatpush.bf16.msra.mxu0 %v574
  %588 = vmatpush.bf16.msra.mxu0 %v573
  %589 = vmatpush.bf16.msra.mxu0 %v572
  %590 = vmatpush.bf16.msra.mxu0 %v571
  %591 = vmatpush.bf16.msra.mxu0 %v570
  %592 = vmatpush.bf16.msra.mxu0 %v569
  %593 = vmatmul.bf16.gmra.mxu0 %v535
  %v594 = vpop.f32.mrf.mxu0
  %v595 = vadd.f32 %v503, %v594
  %v596 = vpop.f32.mrf.mxu0
  %597 = vdwg.mxu0
  %598 = vst [vmem:[%s6] sm:$0xff] %v595
  // Predicated region
  $region26: #{narre_net_forward.3} parent=0 // pred_check
    _
  $region27: #{narre_net_forward.3} parent=0 // pred_check_branch
    %600 = sbr.rel (0) target = $region29
  $region28: #{narre_net_forward.3} parent=0 // pred_region
    _
  $region29: #{narre_net_forward.3} parent=0 // pred_fallthru
    _
  // Predicated region
  $region30: #{narre_net_forward.3} parent=0 // pred_check
    _
  $region31: #{narre_net_forward.3} parent=0 // pred_check_branch
    %602 = sbr.rel (0) target = $region33
  $region32: #{narre_net_forward.3} parent=0 // pred_region
    _
  $region33: #{narre_net_forward.3} parent=0 // pred_fallthru
    _

// kernel: narre_net_forward.2
$region0: #{narre_net_forward.2}
  #allocation0 [shape = 'u32[]', space=smem, size = 0x4, offset = 0x4, fixed_abs, tag = 'smem constant byte address 0x4 - core index']
  #allocation1 [shape = 'u32[72,128]{1,0:T(1,128)}', space=vmem, size = 0x9000, scoped, tag = 'internal scratch']
  %s0 = inlined_call_operand.vmem [shape: bf16[16,256], index: 0, kind: input, shape index: {}]
  %s1 = inlined_call_operand.hbm [shape: bf16[256,768], index: 1, kind: input, shape index: {}]
  %s2 = inlined_call_operand.vmem [shape: f32[1,128], index: 2, kind: input, shape index: {}]
  %s3 = inlined_call_operand.vmem [shape: f32[16,128], index: 3, kind: output, shape index: {}]
  %s4 = sld [smem:[#allocation0]]
  $region26: #{narre_net_forward.2} parent=0
    _
  %s6 = ssub.s32 1, %s4
  %s7 = scalar_select 0, %s6, %s4
  $region1: #{narre_net_forward.2} parent=0
    #allocation2 [shape = 'u8[393216]{0}', space=vmem, size = 0x60000, scoped, tag = 'input window, operand 1, single buffered']
    #allocation3 [shape = 's32[1]{0}', space=sflag, size = 0x4, scoped, tag = 'scoped memory for narre_net_forward.2']
    %8 = vsyncpa [#allocation3], 0
    // Predicated region
    $region2: #{narre_net_forward.2} parent=1 // pred_check
      _
    $region3: #{narre_net_forward.2} parent=1 // pred_check_branch
      %10 = sbr.rel (0) target = $region5
    $region4: #{narre_net_forward.2} parent=1 // pred_region
      _
    $region5: #{narre_net_forward.2} parent=1 // pred_fallthru
      _
    // Predicated region
    $region6: #{narre_net_forward.2} parent=1 // pred_check
      _
    $region7: #{narre_net_forward.2} parent=1 // pred_check_branch
      %12 = sbr.rel (0) target = $region9
    $region8: #{narre_net_forward.2} parent=1 // pred_region
      %14 = vsyncadd [#allocation3], 0
      %s15 = sshll.u32 %s1, 4
      %s16 = int_to_ptr.hbm [resolvable:$true] %s15
      %s17 = sshll.u32 [#allocation2], 4
      %s18 = int_to_ptr.vmem [resolvable:$true] %s17
      %23 = dma.hbm_to_vmem [thread:$0]  %s16, 12288, %s18, [#allocation3], 384, 384, 24
    $region9: #{narre_net_forward.2} parent=1 // pred_fallthru
      _
    // Predicated region
    $region10: #{narre_net_forward.2} parent=1 // pred_check
      _
    $region11: #{narre_net_forward.2} parent=1 // pred_check_branch
      %25 = sbr.rel (0) target = $region13
    $region12: #{narre_net_forward.2} parent=1 // pred_region
      _
    $region13: #{narre_net_forward.2} parent=1 // pred_fallthru
      _
    // Predicated region
    $region14: #{narre_net_forward.2} parent=1 // pred_check
      _
    $region15: #{narre_net_forward.2} parent=1 // pred_check_branch
      %27 = sbr.rel (0) target = $region17
    $region16: #{narre_net_forward.2} parent=1 // pred_region
      %29 = dma.done [#allocation3], 12288
    $region17: #{narre_net_forward.2} parent=1 // pred_fallthru
      _
    %v30 = vld [vmem:[%s0] sm:$0xff]
    %v31 = vld [vmem:[%s0 + $0x8] sm:$0xff]
    %v32 = vld [vmem:[#allocation2] sm:$0xff]
    %v33 = vld [vmem:[#allocation2 + $0x8] sm:$0xff]
    %v34 = vld [vmem:[#allocation2 + $0x10] sm:$0xff]
    %v35 = vld [vmem:[#allocation2 + $0x18] sm:$0xff]
    %v36 = vld [vmem:[#allocation2 + $0x20] sm:$0xff]
    %v37 = vld [vmem:[#allocation2 + $0x28] sm:$0xff]
    %v38 = vld [vmem:[#allocation2 + $0x30] sm:$0xff]
    %v39 = vld [vmem:[#allocation2 + $0x38] sm:$0xff]
    %v40 = vld [vmem:[#allocation2 + $0x40] sm:$0xff]
    %v41 = vld [vmem:[#allocation2 + $0x48] sm:$0xff]
    %v42 = vld [vmem:[#allocation2 + $0x50] sm:$0xff]
    %v43 = vld [vmem:[#allocation2 + $0x58] sm:$0xff]
    %v44 = vld [vmem:[#allocation2 + $0x60] sm:$0xff]
    %v45 = vld [vmem:[#allocation2 + $0x68] sm:$0xff]
    %v46 = vld [vmem:[#allocation2 + $0x70] sm:$0xff]
    %v47 = vld [vmem:[#allocation2 + $0x78] sm:$0xff]
    %v48 = vld [vmem:[#allocation2 + $0x80] sm:$0xff]
    %v49 = vld [vmem:[#allocation2 + $0x88] sm:$0xff]
    %v50 = vld [vmem:[#allocation2 + $0x90] sm:$0xff]
    %v51 = vld [vmem:[#allocation2 + $0x98] sm:$0xff]
    %v52 = vld [vmem:[#allocation2 + $0xa0] sm:$0xff]
    %v53 = vld [vmem:[#allocation2 + $0xa8] sm:$0xff]
    %v54 = vld [vmem:[#allocation2 + $0xb0] sm:$0xff]
    %v55 = vld [vmem:[#allocation2 + $0xb8] sm:$0xff]
    %v56 = vld [vmem:[#allocation2 + $0xc0] sm:$0xff]
    %v57 = vld [vmem:[#allocation2 + $0xc8] sm:$0xff]
    %v58 = vld [vmem:[#allocation2 + $0xd0] sm:$0xff]
    %v59 = vld [vmem:[#allocation2 + $0xd8] sm:$0xff]
    %v60 = vld [vmem:[#allocation2 + $0xe0] sm:$0xff]
    %v61 = vld [vmem:[#allocation2 + $0xe8] sm:$0xff]
    %v62 = vld [vmem:[#allocation2 + $0xf0] sm:$0xff]
    %v63 = vld [vmem:[#allocation2 + $0xf8] sm:$0xff]
    %v64 = vld [vmem:[#allocation2 + $0x100] sm:$0xff]
    %v65 = vld [vmem:[#allocation2 + $0x108] sm:$0xff]
    %v66 = vld [vmem:[#allocation2 + $0x110] sm:$0xff]
    %v67 = vld [vmem:[#allocation2 + $0x118] sm:$0xff]
    %v68 = vld [vmem:[#allocation2 + $0x120] sm:$0xff]
    %v69 = vld [vmem:[#allocation2 + $0x128] sm:$0xff]
    %v70 = vld [vmem:[#allocation2 + $0x130] sm:$0xff]
    %v71 = vld [vmem:[#allocation2 + $0x138] sm:$0xff]
    %v72 = vld [vmem:[#allocation2 + $0x140] sm:$0xff]
    %v73 = vld [vmem:[#allocation2 + $0x148] sm:$0xff]
    %v74 = vld [vmem:[#allocation2 + $0x150] sm:$0xff]
    %v75 = vld [vmem:[#allocation2 + $0x158] sm:$0xff]
    %v76 = vld [vmem:[#allocation2 + $0x160] sm:$0xff]
    %v77 = vld [vmem:[#allocation2 + $0x168] sm:$0xff]
    %v78 = vld [vmem:[#allocation2 + $0x170] sm:$0xff]
    %v79 = vld [vmem:[#allocation2 + $0x178] sm:$0xff]
    %v80 = vld [vmem:[#allocation2 + $0x180] sm:$0xff]
    %v81 = vld [vmem:[#allocation2 + $0x188] sm:$0xff]
    %v82 = vld [vmem:[#allocation2 + $0x190] sm:$0xff]
    %v83 = vld [vmem:[#allocation2 + $0x198] sm:$0xff]
    %v84 = vld [vmem:[#allocation2 + $0x1a0] sm:$0xff]
    %v85 = vld [vmem:[#allocation2 + $0x1a8] sm:$0xff]
    %v86 = vld [vmem:[#allocation2 + $0x1b0] sm:$0xff]
    %v87 = vld [vmem:[#allocation2 + $0x1b8] sm:$0xff]
    %v88 = vld [vmem:[#allocation2 + $0x1c0] sm:$0xff]
    %v89 = vld [vmem:[#allocation2 + $0x1c8] sm:$0xff]
    %v90 = vld [vmem:[#allocation2 + $0x1d0] sm:$0xff]
    %v91 = vld [vmem:[#allocation2 + $0x1d8] sm:$0xff]
    %v92 = vld [vmem:[#allocation2 + $0x1e0] sm:$0xff]
    %v93 = vld [vmem:[#allocation2 + $0x1e8] sm:$0xff]
    %v94 = vld [vmem:[#allocation2 + $0x1f0] sm:$0xff]
    %v95 = vld [vmem:[#allocation2 + $0x1f8] sm:$0xff]
    %v96 = vld [vmem:[#allocation2 + $0x200] sm:$0xff]
    %v97 = vld [vmem:[#allocation2 + $0x208] sm:$0xff]
    %v98 = vld [vmem:[#allocation2 + $0x210] sm:$0xff]
    %v99 = vld [vmem:[#allocation2 + $0x218] sm:$0xff]
    %v100 = vld [vmem:[#allocation2 + $0x220] sm:$0xff]
    %v101 = vld [vmem:[#allocation2 + $0x228] sm:$0xff]
    %v102 = vld [vmem:[#allocation2 + $0x230] sm:$0xff]
    %v103 = vld [vmem:[#allocation2 + $0x238] sm:$0xff]
    %v104 = vld [vmem:[#allocation2 + $0x240] sm:$0xff]
    %v105 = vld [vmem:[#allocation2 + $0x248] sm:$0xff]
    %v106 = vld [vmem:[#allocation2 + $0x250] sm:$0xff]
    %v107 = vld [vmem:[#allocation2 + $0x258] sm:$0xff]
    %v108 = vld [vmem:[#allocation2 + $0x260] sm:$0xff]
    %v109 = vld [vmem:[#allocation2 + $0x268] sm:$0xff]
    %v110 = vld [vmem:[#allocation2 + $0x270] sm:$0xff]
    %v111 = vld [vmem:[#allocation2 + $0x278] sm:$0xff]
    %v112 = vld [vmem:[#allocation2 + $0x280] sm:$0xff]
    %v113 = vld [vmem:[#allocation2 + $0x288] sm:$0xff]
    %v114 = vld [vmem:[#allocation2 + $0x290] sm:$0xff]
    %v115 = vld [vmem:[#allocation2 + $0x298] sm:$0xff]
    %v116 = vld [vmem:[#allocation2 + $0x2a0] sm:$0xff]
    %v117 = vld [vmem:[#allocation2 + $0x2a8] sm:$0xff]
    %v118 = vld [vmem:[#allocation2 + $0x2b0] sm:$0xff]
    %v119 = vld [vmem:[#allocation2 + $0x2b8] sm:$0xff]
    %v120 = vld [vmem:[#allocation2 + $0x2c0] sm:$0xff]
    %v121 = vld [vmem:[#allocation2 + $0x2c8] sm:$0xff]
    %v122 = vld [vmem:[#allocation2 + $0x2d0] sm:$0xff]
    %v123 = vld [vmem:[#allocation2 + $0x2d8] sm:$0xff]
    %v124 = vld [vmem:[#allocation2 + $0x2e0] sm:$0xff]
    %v125 = vld [vmem:[#allocation2 + $0x2e8] sm:$0xff]
    %v126 = vld [vmem:[#allocation2 + $0x2f0] sm:$0xff]
    %v127 = vld [vmem:[#allocation2 + $0x2f8] sm:$0xff]
    %v130 = vunpack.c.l.b16 %v30
    %v131 = vunpack.c.h.b16 %v30
    %v132 = vunpack.c.l.b16 %v31
    %v133 = vunpack.c.h.b16 %v31
    %v134 = vpack.c.b16 %v132, %v130
    %v135 = vpack.c.b16 %v133, %v131
    %v234 = vunpack.c.l.b16 %v32
    %v235 = vunpack.c.h.b16 %v32
    %v236 = vunpack.c.l.b16 %v33
    %v237 = vunpack.c.h.b16 %v33
    %v238 = vunpack.c.l.b16 %v34
    %v239 = vunpack.c.h.b16 %v34
    %v240 = vunpack.c.l.b16 %v35
    %v241 = vunpack.c.h.b16 %v35
    %v242 = vunpack.c.l.b16 %v36
    %v243 = vunpack.c.h.b16 %v36
    %v244 = vunpack.c.l.b16 %v37
    %v245 = vunpack.c.h.b16 %v37
    %v246 = vunpack.c.l.b16 %v38
    %v247 = vunpack.c.h.b16 %v38
    %v248 = vunpack.c.l.b16 %v39
    %v249 = vunpack.c.h.b16 %v39
    %v250 = vunpack.c.l.b16 %v40
    %v251 = vunpack.c.h.b16 %v40
    %v252 = vunpack.c.l.b16 %v41
    %v253 = vunpack.c.h.b16 %v41
    %v254 = vunpack.c.l.b16 %v42
    %v255 = vunpack.c.h.b16 %v42
    %v256 = vunpack.c.l.b16 %v43
    %v257 = vunpack.c.h.b16 %v43
    %v258 = vunpack.c.l.b16 %v44
    %v259 = vunpack.c.h.b16 %v44
    %v260 = vunpack.c.l.b16 %v45
    %v261 = vunpack.c.h.b16 %v45
    %v262 = vunpack.c.l.b16 %v46
    %v263 = vunpack.c.h.b16 %v46
    %v264 = vunpack.c.l.b16 %v47
    %v265 = vunpack.c.h.b16 %v47
    %v266 = vunpack.c.l.b16 %v48
    %v267 = vunpack.c.h.b16 %v48
    %v268 = vunpack.c.l.b16 %v49
    %v269 = vunpack.c.h.b16 %v49
    %v270 = vunpack.c.l.b16 %v50
    %v271 = vunpack.c.h.b16 %v50
    %v272 = vunpack.c.l.b16 %v51
    %v273 = vunpack.c.h.b16 %v51
    %v274 = vunpack.c.l.b16 %v52
    %v275 = vunpack.c.h.b16 %v52
    %v276 = vunpack.c.l.b16 %v53
    %v277 = vunpack.c.h.b16 %v53
    %v278 = vunpack.c.l.b16 %v54
    %v279 = vunpack.c.h.b16 %v54
    %v280 = vunpack.c.l.b16 %v55
    %v281 = vunpack.c.h.b16 %v55
    %v282 = vunpack.c.l.b16 %v56
    %v283 = vunpack.c.h.b16 %v56
    %v284 = vunpack.c.l.b16 %v57
    %v285 = vunpack.c.h.b16 %v57
    %v286 = vunpack.c.l.b16 %v58
    %v287 = vunpack.c.h.b16 %v58
    %v288 = vunpack.c.l.b16 %v59
    %v289 = vunpack.c.h.b16 %v59
    %v290 = vunpack.c.l.b16 %v60
    %v291 = vunpack.c.h.b16 %v60
    %v292 = vunpack.c.l.b16 %v61
    %v293 = vunpack.c.h.b16 %v61
    %v294 = vunpack.c.l.b16 %v62
    %v295 = vunpack.c.h.b16 %v62
    %v296 = vunpack.c.l.b16 %v63
    %v297 = vunpack.c.h.b16 %v63
    %v298 = vunpack.c.l.b16 %v64
    %v299 = vunpack.c.h.b16 %v64
    %v300 = vunpack.c.l.b16 %v65
    %v301 = vunpack.c.h.b16 %v65
    %v302 = vunpack.c.l.b16 %v66
    %v303 = vunpack.c.h.b16 %v66
    %v304 = vunpack.c.l.b16 %v67
    %v305 = vunpack.c.h.b16 %v67
    %v306 = vunpack.c.l.b16 %v68
    %v307 = vunpack.c.h.b16 %v68
    %v308 = vunpack.c.l.b16 %v69
    %v309 = vunpack.c.h.b16 %v69
    %v310 = vunpack.c.l.b16 %v70
    %v311 = vunpack.c.h.b16 %v70
    %v312 = vunpack.c.l.b16 %v71
    %v313 = vunpack.c.h.b16 %v71
    %v314 = vunpack.c.l.b16 %v72
    %v315 = vunpack.c.h.b16 %v72
    %v316 = vunpack.c.l.b16 %v73
    %v317 = vunpack.c.h.b16 %v73
    %v318 = vunpack.c.l.b16 %v74
    %v319 = vunpack.c.h.b16 %v74
    %v320 = vunpack.c.l.b16 %v75
    %v321 = vunpack.c.h.b16 %v75
    %v322 = vunpack.c.l.b16 %v76
    %v323 = vunpack.c.h.b16 %v76
    %v324 = vunpack.c.l.b16 %v77
    %v325 = vunpack.c.h.b16 %v77
    %v326 = vunpack.c.l.b16 %v78
    %v327 = vunpack.c.h.b16 %v78
    %v328 = vunpack.c.l.b16 %v79
    %v329 = vunpack.c.h.b16 %v79
    %v330 = vunpack.c.l.b16 %v80
    %v331 = vunpack.c.h.b16 %v80
    %v332 = vunpack.c.l.b16 %v81
    %v333 = vunpack.c.h.b16 %v81
    %v334 = vunpack.c.l.b16 %v82
    %v335 = vunpack.c.h.b16 %v82
    %v336 = vunpack.c.l.b16 %v83
    %v337 = vunpack.c.h.b16 %v83
    %v338 = vunpack.c.l.b16 %v84
    %v339 = vunpack.c.h.b16 %v84
    %v340 = vunpack.c.l.b16 %v85
    %v341 = vunpack.c.h.b16 %v85
    %v342 = vunpack.c.l.b16 %v86
    %v343 = vunpack.c.h.b16 %v86
    %v344 = vunpack.c.l.b16 %v87
    %v345 = vunpack.c.h.b16 %v87
    %v346 = vunpack.c.l.b16 %v88
    %v347 = vunpack.c.h.b16 %v88
    %v348 = vunpack.c.l.b16 %v89
    %v349 = vunpack.c.h.b16 %v89
    %v350 = vunpack.c.l.b16 %v90
    %v351 = vunpack.c.h.b16 %v90
    %v352 = vunpack.c.l.b16 %v91
    %v353 = vunpack.c.h.b16 %v91
    %v354 = vunpack.c.l.b16 %v92
    %v355 = vunpack.c.h.b16 %v92
    %v356 = vunpack.c.l.b16 %v93
    %v357 = vunpack.c.h.b16 %v93
    %v358 = vunpack.c.l.b16 %v94
    %v359 = vunpack.c.h.b16 %v94
    %v360 = vunpack.c.l.b16 %v95
    %v361 = vunpack.c.h.b16 %v95
    %v362 = vunpack.c.l.b16 %v96
    %v363 = vunpack.c.h.b16 %v96
    %v364 = vunpack.c.l.b16 %v97
    %v365 = vunpack.c.h.b16 %v97
    %v366 = vunpack.c.l.b16 %v98
    %v367 = vunpack.c.h.b16 %v98
    %v368 = vunpack.c.l.b16 %v99
    %v369 = vunpack.c.h.b16 %v99
    %v370 = vunpack.c.l.b16 %v100
    %v371 = vunpack.c.h.b16 %v100
    %v372 = vunpack.c.l.b16 %v101
    %v373 = vunpack.c.h.b16 %v101
    %v374 = vunpack.c.l.b16 %v102
    %v375 = vunpack.c.h.b16 %v102
    %v376 = vunpack.c.l.b16 %v103
    %v377 = vunpack.c.h.b16 %v103
    %v378 = vunpack.c.l.b16 %v104
    %v379 = vunpack.c.h.b16 %v104
    %v380 = vunpack.c.l.b16 %v105
    %v381 = vunpack.c.h.b16 %v105
    %v382 = vunpack.c.l.b16 %v106
    %v383 = vunpack.c.h.b16 %v106
    %v384 = vunpack.c.l.b16 %v107
    %v385 = vunpack.c.h.b16 %v107
    %v386 = vunpack.c.l.b16 %v108
    %v387 = vunpack.c.h.b16 %v108
    %v388 = vunpack.c.l.b16 %v109
    %v389 = vunpack.c.h.b16 %v109
    %v390 = vunpack.c.l.b16 %v110
    %v391 = vunpack.c.h.b16 %v110
    %v392 = vunpack.c.l.b16 %v111
    %v393 = vunpack.c.h.b16 %v111
    %v394 = vunpack.c.l.b16 %v112
    %v395 = vunpack.c.h.b16 %v112
    %v396 = vunpack.c.l.b16 %v113
    %v397 = vunpack.c.h.b16 %v113
    %v398 = vunpack.c.l.b16 %v114
    %v399 = vunpack.c.h.b16 %v114
    %v400 = vunpack.c.l.b16 %v115
    %v401 = vunpack.c.h.b16 %v115
    %v402 = vunpack.c.l.b16 %v116
    %v403 = vunpack.c.h.b16 %v116
    %v404 = vunpack.c.l.b16 %v117
    %v405 = vunpack.c.h.b16 %v117
    %v406 = vunpack.c.l.b16 %v118
    %v407 = vunpack.c.h.b16 %v118
    %v408 = vunpack.c.l.b16 %v119
    %v409 = vunpack.c.h.b16 %v119
    %v410 = vunpack.c.l.b16 %v120
    %v411 = vunpack.c.h.b16 %v120
    %v412 = vunpack.c.l.b16 %v121
    %v413 = vunpack.c.h.b16 %v121
    %v414 = vunpack.c.l.b16 %v122
    %v415 = vunpack.c.h.b16 %v122
    %v416 = vunpack.c.l.b16 %v123
    %v417 = vunpack.c.h.b16 %v123
    %v418 = vunpack.c.l.b16 %v124
    %v419 = vunpack.c.h.b16 %v124
    %v420 = vunpack.c.l.b16 %v125
    %v421 = vunpack.c.h.b16 %v125
    %v422 = vunpack.c.l.b16 %v126
    %v423 = vunpack.c.h.b16 %v126
    %v424 = vunpack.c.l.b16 %v127
    %v425 = vunpack.c.h.b16 %v127
    %v426 = vpack.c.b16 %v240, %v234
    %v427 = vpack.c.b16 %v241, %v235
    %v428 = vpack.c.b16 %v242, %v236
    %v429 = vpack.c.b16 %v243, %v237
    %v430 = vpack.c.b16 %v244, %v238
    %v431 = vpack.c.b16 %v245, %v239
    %v432 = vpack.c.b16 %v252, %v246
    %v433 = vpack.c.b16 %v253, %v247
    %v434 = vpack.c.b16 %v254, %v248
    %v435 = vpack.c.b16 %v255, %v249
    %v436 = vpack.c.b16 %v256, %v250
    %v437 = vpack.c.b16 %v257, %v251
    %v438 = vpack.c.b16 %v264, %v258
    %v439 = vpack.c.b16 %v265, %v259
    %v440 = vpack.c.b16 %v266, %v260
    %v441 = vpack.c.b16 %v267, %v261
    %v442 = vpack.c.b16 %v268, %v262
    %v443 = vpack.c.b16 %v269, %v263
    %v444 = vpack.c.b16 %v276, %v270
    %v445 = vpack.c.b16 %v277, %v271
    %v446 = vpack.c.b16 %v278, %v272
    %v447 = vpack.c.b16 %v279, %v273
    %v448 = vpack.c.b16 %v280, %v274
    %v449 = vpack.c.b16 %v281, %v275
    %v450 = vpack.c.b16 %v288, %v282
    %v451 = vpack.c.b16 %v289, %v283
    %v452 = vpack.c.b16 %v290, %v284
    %v453 = vpack.c.b16 %v291, %v285
    %v454 = vpack.c.b16 %v292, %v286
    %v455 = vpack.c.b16 %v293, %v287
    %v456 = vpack.c.b16 %v300, %v294
    %v457 = vpack.c.b16 %v301, %v295
    %v458 = vpack.c.b16 %v302, %v296
    %v459 = vpack.c.b16 %v303, %v297
    %v460 = vpack.c.b16 %v304, %v298
    %v461 = vpack.c.b16 %v305, %v299
    %v462 = vpack.c.b16 %v312, %v306
    %v463 = vpack.c.b16 %v313, %v307
    %v464 = vpack.c.b16 %v314, %v308
    %v465 = vpack.c.b16 %v315, %v309
    %v466 = vpack.c.b16 %v316, %v310
    %v467 = vpack.c.b16 %v317, %v311
    %v468 = vpack.c.b16 %v324, %v318
    %v469 = vpack.c.b16 %v325, %v319
    %v470 = vpack.c.b16 %v326, %v320
    %v471 = vpack.c.b16 %v327, %v321
    %v472 = vpack.c.b16 %v328, %v322
    %v473 = vpack.c.b16 %v329, %v323
    %v474 = vpack.c.b16 %v336, %v330
    %v475 = vpack.c.b16 %v337, %v331
    %v476 = vpack.c.b16 %v338, %v332
    %v477 = vpack.c.b16 %v339, %v333
    %v478 = vpack.c.b16 %v340, %v334
    %v479 = vpack.c.b16 %v341, %v335
    %v480 = vpack.c.b16 %v348, %v342
    %v481 = vpack.c.b16 %v349, %v343
    %v482 = vpack.c.b16 %v350, %v344
    %v483 = vpack.c.b16 %v351, %v345
    %v484 = vpack.c.b16 %v352, %v346
    %v485 = vpack.c.b16 %v353, %v347
    %v486 = vpack.c.b16 %v360, %v354
    %v487 = vpack.c.b16 %v361, %v355
    %v488 = vpack.c.b16 %v362, %v356
    %v489 = vpack.c.b16 %v363, %v357
    %v490 = vpack.c.b16 %v364, %v358
    %v491 = vpack.c.b16 %v365, %v359
    %v492 = vpack.c.b16 %v372, %v366
    %v493 = vpack.c.b16 %v373, %v367
    %v494 = vpack.c.b16 %v374, %v368
    %v495 = vpack.c.b16 %v375, %v369
    %v496 = vpack.c.b16 %v376, %v370
    %v497 = vpack.c.b16 %v377, %v371
    %v498 = vpack.c.b16 %v384, %v378
    %v499 = vpack.c.b16 %v385, %v379
    %v500 = vpack.c.b16 %v386, %v380
    %v501 = vpack.c.b16 %v387, %v381
    %v502 = vpack.c.b16 %v388, %v382
    %v503 = vpack.c.b16 %v389, %v383
    %v504 = vpack.c.b16 %v396, %v390
    %v505 = vpack.c.b16 %v397, %v391
    %v506 = vpack.c.b16 %v398, %v392
    %v507 = vpack.c.b16 %v399, %v393
    %v508 = vpack.c.b16 %v400, %v394
    %v509 = vpack.c.b16 %v401, %v395
    %v510 = vpack.c.b16 %v408, %v402
    %v511 = vpack.c.b16 %v409, %v403
    %v512 = vpack.c.b16 %v410, %v404
    %v513 = vpack.c.b16 %v411, %v405
    %v514 = vpack.c.b16 %v412, %v406
    %v515 = vpack.c.b16 %v413, %v407
    %v516 = vpack.c.b16 %v420, %v414
    %v517 = vpack.c.b16 %v421, %v415
    %v518 = vpack.c.b16 %v422, %v416
    %v519 = vpack.c.b16 %v423, %v417
    %v520 = vpack.c.b16 %v424, %v418
    %v521 = vpack.c.b16 %v425, %v419
    %618 = vmatpush.bf16.msra.mxu0 %v468
    %619 = vmatpush.bf16.msra.mxu0 %v462
    %620 = vmatpush.bf16.msra.mxu0 %v456
    %621 = vmatpush.bf16.msra.mxu0 %v450
    %622 = vmatpush.bf16.msra.mxu0 %v444
    %623 = vmatpush.bf16.msra.mxu0 %v438
    %624 = vmatpush.bf16.msra.mxu0 %v432
    %625 = vmatpush.bf16.msra.mxu0 %v426
    %626 = vmatmul.bf16.gmra.mxu0 %v134
    %v627 = vpop.f32.mrf.mxu0
    %v628 = vadd.f32 0.0, %v627
    %v629 = vpop.f32.mrf.mxu0
    %v630 = vadd.f32 0.0, %v629
    %631 = vdwg.mxu0
    %632 = vmatpush.bf16.msra.mxu0 %v516
    %633 = vmatpush.bf16.msra.mxu0 %v510
    %634 = vmatpush.bf16.msra.mxu0 %v504
    %635 = vmatpush.bf16.msra.mxu0 %v498
    %636 = vmatpush.bf16.msra.mxu0 %v492
    %637 = vmatpush.bf16.msra.mxu0 %v486
    %638 = vmatpush.bf16.msra.mxu0 %v480
    %639 = vmatpush.bf16.msra.mxu0 %v474
    %640 = vmatmul.bf16.gmra.mxu0 %v135
    %v641 = vpop.f32.mrf.mxu0
    %v642 = vadd.f32 %v628, %v641
    %v643 = vpop.f32.mrf.mxu0
    %v644 = vadd.f32 %v630, %v643
    %645 = vdwg.mxu0
    %646 = vmatpush.bf16.msra.mxu0 %v469
    %647 = vmatpush.bf16.msra.mxu0 %v463
    %648 = vmatpush.bf16.msra.mxu0 %v457
    %649 = vmatpush.bf16.msra.mxu0 %v451
    %650 = vmatpush.bf16.msra.mxu0 %v445
    %651 = vmatpush.bf16.msra.mxu0 %v439
    %652 = vmatpush.bf16.msra.mxu0 %v433
    %653 = vmatpush.bf16.msra.mxu0 %v427
    %654 = vmatmul.bf16.gmra.mxu0 %v134
    %v655 = vpop.f32.mrf.mxu0
    %v656 = vadd.f32 0.0, %v655
    %v657 = vpop.f32.mrf.mxu0
    %v658 = vadd.f32 0.0, %v657
    %659 = vdwg.mxu0
    %660 = vmatpush.bf16.msra.mxu0 %v517
    %661 = vmatpush.bf16.msra.mxu0 %v511
    %662 = vmatpush.bf16.msra.mxu0 %v505
    %663 = vmatpush.bf16.msra.mxu0 %v499
    %664 = vmatpush.bf16.msra.mxu0 %v493
    %665 = vmatpush.bf16.msra.mxu0 %v487
    %666 = vmatpush.bf16.msra.mxu0 %v481
    %667 = vmatpush.bf16.msra.mxu0 %v475
    %668 = vmatmul.bf16.gmra.mxu0 %v135
    %v669 = vpop.f32.mrf.mxu0
    %v670 = vadd.f32 %v656, %v669
    %v671 = vpop.f32.mrf.mxu0
    %v672 = vadd.f32 %v658, %v671
    %673 = vdwg.mxu0
    %674 = vmatpush.bf16.msra.mxu0 %v470
    %675 = vmatpush.bf16.msra.mxu0 %v464
    %676 = vmatpush.bf16.msra.mxu0 %v458
    %677 = vmatpush.bf16.msra.mxu0 %v452
    %678 = vmatpush.bf16.msra.mxu0 %v446
    %679 = vmatpush.bf16.msra.mxu0 %v440
    %680 = vmatpush.bf16.msra.mxu0 %v434
    %681 = vmatpush.bf16.msra.mxu0 %v428
    %682 = vmatmul.bf16.gmra.mxu0 %v134
    %v683 = vpop.f32.mrf.mxu0
    %v684 = vadd.f32 0.0, %v683
    %v685 = vpop.f32.mrf.mxu0
    %v686 = vadd.f32 0.0, %v685
    %687 = vdwg.mxu0
    %688 = vmatpush.bf16.msra.mxu0 %v518
    %689 = vmatpush.bf16.msra.mxu0 %v512
    %690 = vmatpush.bf16.msra.mxu0 %v506
    %691 = vmatpush.bf16.msra.mxu0 %v500
    %692 = vmatpush.bf16.msra.mxu0 %v494
    %693 = vmatpush.bf16.msra.mxu0 %v488
    %694 = vmatpush.bf16.msra.mxu0 %v482
    %695 = vmatpush.bf16.msra.mxu0 %v476
    %696 = vmatmul.bf16.gmra.mxu0 %v135
    %v697 = vpop.f32.mrf.mxu0
    %v698 = vadd.f32 %v684, %v697
    %v699 = vpop.f32.mrf.mxu0
    %v700 = vadd.f32 %v686, %v699
    %701 = vdwg.mxu0
    %702 = vmatpush.bf16.msra.mxu0 %v471
    %703 = vmatpush.bf16.msra.mxu0 %v465
    %704 = vmatpush.bf16.msra.mxu0 %v459
    %705 = vmatpush.bf16.msra.mxu0 %v453
    %706 = vmatpush.bf16.msra.mxu0 %v447
    %707 = vmatpush.bf16.msra.mxu0 %v441
    %708 = vmatpush.bf16.msra.mxu0 %v435
    %709 = vmatpush.bf16.msra.mxu0 %v429
    %710 = vmatmul.bf16.gmra.mxu0 %v134
    %v711 = vpop.f32.mrf.mxu0
    %v712 = vadd.f32 0.0, %v711
    %v713 = vpop.f32.mrf.mxu0
    %v714 = vadd.f32 0.0, %v713
    %715 = vdwg.mxu0
    %716 = vmatpush.bf16.msra.mxu0 %v519
    %717 = vmatpush.bf16.msra.mxu0 %v513
    %718 = vmatpush.bf16.msra.mxu0 %v507
    %719 = vmatpush.bf16.msra.mxu0 %v501
    %720 = vmatpush.bf16.msra.mxu0 %v495
    %721 = vmatpush.bf16.msra.mxu0 %v489
    %722 = vmatpush.bf16.msra.mxu0 %v483
    %723 = vmatpush.bf16.msra.mxu0 %v477
    %724 = vmatmul.bf16.gmra.mxu0 %v135
    %v725 = vpop.f32.mrf.mxu0
    %v726 = vadd.f32 %v712, %v725
    %v727 = vpop.f32.mrf.mxu0
    %v728 = vadd.f32 %v714, %v727
    %729 = vdwg.mxu0
    %730 = vmatpush.bf16.msra.mxu0 %v472
    %731 = vmatpush.bf16.msra.mxu0 %v466
    %732 = vmatpush.bf16.msra.mxu0 %v460
    %733 = vmatpush.bf16.msra.mxu0 %v454
    %734 = vmatpush.bf16.msra.mxu0 %v448
    %735 = vmatpush.bf16.msra.mxu0 %v442
    %736 = vmatpush.bf16.msra.mxu0 %v436
    %737 = vmatpush.bf16.msra.mxu0 %v430
    %738 = vmatmul.bf16.gmra.mxu0 %v134
    %v739 = vpop.f32.mrf.mxu0
    %v740 = vadd.f32 0.0, %v739
    %v741 = vpop.f32.mrf.mxu0
    %v742 = vadd.f32 0.0, %v741
    %743 = vdwg.mxu0
    %744 = vmatpush.bf16.msra.mxu0 %v520
    %745 = vmatpush.bf16.msra.mxu0 %v514
    %746 = vmatpush.bf16.msra.mxu0 %v508
    %747 = vmatpush.bf16.msra.mxu0 %v502
    %748 = vmatpush.bf16.msra.mxu0 %v496
    %749 = vmatpush.bf16.msra.mxu0 %v490
    %750 = vmatpush.bf16.msra.mxu0 %v484
    %751 = vmatpush.bf16.msra.mxu0 %v478
    %752 = vmatmul.bf16.gmra.mxu0 %v135
    %v753 = vpop.f32.mrf.mxu0
    %v754 = vadd.f32 %v740, %v753
    %v755 = vpop.f32.mrf.mxu0
    %v756 = vadd.f32 %v742, %v755
    %757 = vdwg.mxu0
    %758 = vmatpush.bf16.msra.mxu0 %v473
    %759 = vmatpush.bf16.msra.mxu0 %v467
    %760 = vmatpush.bf16.msra.mxu0 %v461
    %761 = vmatpush.bf16.msra.mxu0 %v455
    %762 = vmatpush.bf16.msra.mxu0 %v449
    %763 = vmatpush.bf16.msra.mxu0 %v443
    %764 = vmatpush.bf16.msra.mxu0 %v437
    %765 = vmatpush.bf16.msra.mxu0 %v431
    %766 = vmatmul.bf16.gmra.mxu0 %v134
    %v767 = vpop.f32.mrf.mxu0
    %v768 = vadd.f32 0.0, %v767
    %v769 = vpop.f32.mrf.mxu0
    %v770 = vadd.f32 0.0, %v769
    %771 = vdwg.mxu0
    %772 = vmatpush.bf16.msra.mxu0 %v521
    %773 = vmatpush.bf16.msra.mxu0 %v515
    %774 = vmatpush.bf16.msra.mxu0 %v509
    %775 = vmatpush.bf16.msra.mxu0 %v503
    %776 = vmatpush.bf16.msra.mxu0 %v497
    %777 = vmatpush.bf16.msra.mxu0 %v491
    %778 = vmatpush.bf16.msra.mxu0 %v485
    %779 = vmatpush.bf16.msra.mxu0 %v479
    %780 = vmatmul.bf16.gmra.mxu0 %v135
    %v781 = vpop.f32.mrf.mxu0
    %v782 = vadd.f32 %v768, %v781
    %v783 = vpop.f32.mrf.mxu0
    %v784 = vadd.f32 %v770, %v783
    %785 = vdwg.mxu0
    %v786 = vmax.f32 %v642, %v670
    %v787 = vmax.f32 %v644, %v672
    %v788 = vmax.f32 %v786, %v698
    %v789 = vmax.f32 %v787, %v700
    %v790 = vmax.f32 %v788, %v726
    %v791 = vmax.f32 %v789, %v728
    %v792 = vmax.f32 %v790, %v754
    %v793 = vmax.f32 %v791, %v756
    %v794 = vmax.f32 %v792, %v782
    %v795 = vmax.f32 %v793, %v784
    %v796 = vld [vmem:[%s2] sm:$0x1]
    %v798 = vperm.slane %v796, 0
    %v800 = vadd.f32 %v794, %v798
    %v801 = vadd.f32 %v795, %v798
    %v802 = vmax.f32 %v800, 0.0
    %v803 = vmax.f32 %v801, 0.0
    %804 = vst [vmem:[%s3] sm:$0xff] %v802
    %805 = vst [vmem:[%s3 + $0x8] sm:$0xff] %v803
    // Predicated region
    $region18: #{narre_net_forward.2} parent=1 // pred_check
      _
    $region19: #{narre_net_forward.2} parent=1 // pred_check_branch
      %807 = sbr.rel (0) target = $region21
    $region20: #{narre_net_forward.2} parent=1 // pred_region
      _
    $region21: #{narre_net_forward.2} parent=1 // pred_fallthru
      _
    // Predicated region
    $region22: #{narre_net_forward.2} parent=1 // pred_check
      _
    $region23: #{narre_net_forward.2} parent=1 // pred_check_branch
      %809 = sbr.rel (0) target = $region25
    $region24: #{narre_net_forward.2} parent=1 // pred_region
      _
    $region25: #{narre_net_forward.2} parent=1 // pred_fallthru
      _
    %810 = vsyncpa [#allocation3], 1

</llo_original>
